<compile_context>
chip_gen: v5e
topology: v5e:2x2
jax: 0.10.0
libtpu: 0.0.40
codegen_flags: <defaults>
</compile_context>

<pallas_src>
import jax
import jax.numpy as jnp
from jax.scipy.linalg import expm as _expm
from jax.experimental import pallas as pl
from jax.experimental.pallas import tpu as pltpu

# ---- sizes (small demo shapes consistent with the module) ------------------
B = 8                 # batch
N = 8                 # input_size (= output_size)
H = 16                # hidden_size (padding_size = H - N)
L = 32                # latent_size
NUM_BLOCKS = 2        # residual blocks per ResNet
NLAYERS = 4 * NUM_BLOCKS           # decoder layers [0:4), encoder layers [4:8)
TAYLOR_ORDER = 10     # matrix-exp Taylor order (||dt*A|| ~ 0.2 -> err << 1e-10)
G = 32                # padded GRU gate width (3N = 24 -> 32)
PCOLS = ((TAYLOR_ORDER * L + 127) // 128) * 128    # 384 (lane-dense Taylor slab)
OUT_LANES = 128       # packed output lanes: [z_post | z_pre | zero pad]


# ---------------------------------------------------------------------------
# Fused kernel (one grid step = one cell forward):
#   decoder ResNet -> projection -> filter (GRUCell) -> embedding -> encoder
#   ResNet -> LinODE system (flattened Taylor action of expm(dt*A))
# ---------------------------------------------------------------------------
def fused_latent_cell_kernel(
    x_obs_ref,      # (1, B, L)  obs in lanes [0:N), duplicated in [N:2N), zeros elsewhere
    dt_ref,         # (1, B, 1)
    z0_ref,         # (B, L)     initial latent (used at t == 0 only)
    res_W_ref,      # (NLAYERS, L, L)   decoder layers then encoder layers
    res_b_ref,      # (NLAYERS, L)
    gru_W_ref,      # (2, L, G)  [0] = input weights (rows = y | mask), [1] = hidden weights
    gru_b_ref,      # (2, G)
    misc_W_ref,     # (2, L, L)  [0] = decoder head (ConcatProjection folded), [1] = embedding + lift
    misc_b_ref,     # (2, L)
    P_ref,          # (L, PCOLS) flattened Taylor operator: cols [(k-1)L:kL) = (A^T)^k / k!
    out_ref,        # (1, B, OUT_LANES) packed [z_post | z_pre | 0]
    z_state_ref,    # VMEM scratch (B, L): latent carried across time steps
):
    f32 = jnp.float32
    t = pl.program_id(0)

    @pl.when(t == 0)
    def _():
        z_state_ref[...] = z0_ref[...]

    z = z_state_ref[...]

    def res_block(x, idx):
        h = jnp.maximum(x, 0.0)
        h = jnp.dot(h, res_W_ref[idx], preferred_element_type=f32) + res_b_ref[idx]
        h = jnp.maximum(h, 0.0)
        h = jnp.dot(h, res_W_ref[idx + 1], preferred_element_type=f32) + res_b_ref[idx + 1]
        return x + h

    # ---- decoder: ResNet on latent (blocks of ReverseDense = ReLU -> Linear) ----
    h = z
    for blk in range(NUM_BLOCKS):
        h = res_block(h, 2 * blk)

    # ---- decoder head + ConcatProjection, folded into a zero-padded (L, L) slab:
    #      full-width matmul, no ref slices; x_pre lives in lanes [0:N), zeros elsewhere.
    x_pre_pad = jnp.dot(h, misc_W_ref[0], preferred_element_type=f32) + misc_b_ref[0]

    # ---- RecurrentCellFilter (autoregressive, concat_mask, GRUCell 2N->N) ----
    xo = x_obs_ref[0]                                  # (B, L)
    nan_mask = xo != xo                                # isnan (also in duplicated lanes)
    lane = jax.lax.broadcasted_iota(jnp.int32, (B, L), 1)
    y_full = jnp.where(nan_mask, x_pre_pad, xo)        # impute missing obs with x_pre
    # [y | mask] in ONE L-wide slab: y in lanes [0:N), mask in [N:2N) — no lane shifts.
    ym = jnp.where(lane < N, y_full,
                   jnp.where(lane < 2 * N, nan_mask.astype(f32), 0.0))

    gi = jnp.dot(ym, gru_W_ref[0], preferred_element_type=f32) + gru_b_ref[0]        # (B, G)
    gh = jnp.dot(x_pre_pad, gru_W_ref[1], preferred_element_type=f32) + gru_b_ref[1]  # (B, G)

    sig = jax.nn.sigmoid(gi + gh)                      # one EUP pass covers r and u gates
    r = sig[:, 0:N]
    u = sig[:, N:2 * N]
    n = jnp.tanh(gi[:, 2 * N:3 * N] + r * gh[:, 2 * N:3 * N])
    hidden = x_pre_pad[:, 0:N]                         # autoregressive: hidden = x_pre
    x_post = (1.0 - u) * n + u * hidden                # (B, N)
    x_post_pad = jnp.concatenate([x_post, jnp.zeros((B, L - N), f32)], axis=-1)

    # ---- ConcatEmbedding (learned padding folded into bias) + encoder lift ----
    e = jnp.dot(x_post_pad, misc_W_ref[1], preferred_element_type=f32) + misc_b_ref[1]

    # ---- encoder: ResNet on latent ----
    for blk in range(NUM_BLOCKS):
        e = res_block(e, 2 * (NUM_BLOCKS + blk))
    z_post = e

    # ---- LinODECell: z_pre = expm(dt*A) @ z_post via flattened Taylor action:
    #      ONE lane-dense (B, L) @ (L, PCOLS) matmul produces all z_post @ (A^T)^k / k!
    #      terms, then TAYLOR_ORDER cheap VPU FMAs weighted by dt^k.
    terms = jnp.dot(z_post, P_ref[...], preferred_element_type=f32)   # (B, PCOLS)
    dt = dt_ref[0]                                                    # (B, 1)
    acc = z_post
    c = dt
    for k in range(TAYLOR_ORDER):
        acc = acc + c * terms[:, k * L:(k + 1) * L]
        c = c * dt
    z_pre = acc

    # carry the propagated latent into the next step
    z_state_ref[...] = z_pre

    # lane-dense packed output (128 lanes): [z_post | z_pre | zero pad]
    out_ref[0] = jnp.concatenate(
        [z_post, z_pre, jnp.zeros((B, OUT_LANES - 2 * L), f32)], axis=-1)


# ---------------------------------------------------------------------------
# Wrappers: one pallas_call over T steps; weights VMEM-resident (constant blocks).
# ---------------------------------------------------------------------------
def latent_linode_cell_rollout(x_obs_seq, z0, dt_seq, packed):
    """x_obs_seq: (T, B, N) (may contain NaN), z0: (B, L), dt_seq: (T, B)."""
    T = x_obs_seq.shape[0]
    # glue: pack observations into a lane-dense slab, duplicated so the mask
    # lands in lanes [N:2N) inside the kernel without a lane shift.
    x_slab = jnp.zeros((T, B, L), jnp.float32)
    x_slab = x_slab.at[:, :, 0:N].set(x_obs_seq)
    x_slab = x_slab.at[:, :, N:2 * N].set(x_obs_seq)
    dt_in = dt_seq.reshape(T, B, 1).astype(jnp.float32)

    const3 = lambda t: (0, 0, 0)
    const2 = lambda t: (0, 0)

    out = pl.pallas_call(
        fused_latent_cell_kernel,
        out_shape=jax.ShapeDtypeStruct((T, B, OUT_LANES), jnp.float32),
        grid_spec=pltpu.PrefetchScalarGridSpec(
            num_scalar_prefetch=0,
            grid=(T,),
            in_specs=[
                pl.BlockSpec((1, B, L), lambda t: (t, 0, 0)),      # x_obs slab (per step)
                pl.BlockSpec((1, B, 1), lambda t: (t, 0, 0)),      # dt (per step)
                pl.BlockSpec((B, L), const2),                      # z0 (constant)
                pl.BlockSpec((NLAYERS, L, L), const3),             # res_W (constant)
                pl.BlockSpec((NLAYERS, L), const2),                # res_b
                pl.BlockSpec((2, L, G), const3),                   # gru_W
                pl.BlockSpec((2, G), const2),                      # gru_b
                pl.BlockSpec((2, L, L), const3),                   # misc_W
                pl.BlockSpec((2, L), const2),                      # misc_b
                pl.BlockSpec((L, PCOLS), const2),                  # Taylor operator P
            ],
            out_specs=pl.BlockSpec((1, B, OUT_LANES), lambda t: (t, 0, 0)),
            scratch_shapes=[pltpu.VMEM((B, L), jnp.float32)],      # carried latent state
        ),
        compiler_params=pltpu.CompilerParams(
            dimension_semantics=("arbitrary",),        # time is a carried recurrence
            vmem_limit_bytes=32 * 1024 * 1024,         # sized well under v7x's 64 MiB
        ),
    )(x_slab, dt_in, z0, packed["res_W"], packed["res_b"], packed["gru_W"],
      packed["gru_b"], packed["misc_W"], packed["misc_b"], packed["P"])

    z_post_seq = out[:, :, 0:L]
    z_pre_seq = out[:, :, L:2 * L]
    return z_post_seq, z_pre_seq


def latent_linode_cell_forward(x_obs, z, dt, packed):
    """Single-step module forward: returns (z_post, z_pre)."""
    z_post_seq, z_pre_seq = latent_linode_cell_rollout(x_obs[None], z, dt[None], packed)
    return z_post_seq[0], z_pre_seq[0]


# ---------------------------------------------------------------------------
# Deterministic parameter init in raw torch layout, and packing into the
# coalesced lane-dense slabs the kernel expects.
# ---------------------------------------------------------------------------
def init_raw_params(key):
    def linear(k, fan_in, fan_out, scale_b=0.01):
        k1, k2 = jax.random.split(k)
        W = jax.random.normal(k1, (fan_out, fan_in), jnp.float32) / jnp.sqrt(fan_in)  # torch (out, in)
        b = jax.random.normal(k2, (fan_out,), jnp.float32) * scale_b
        return W, b

    keys = jax.random.split(key, 16)
    dec_layers = [linear(keys[i], L, L) for i in range(2 * NUM_BLOCKS)]
    enc_layers = [linear(keys[4 + i], L, L) for i in range(2 * NUM_BLOCKS)]
    Wout, bout = linear(keys[8], L, H)                 # decoder head Linear(L -> H)

    kg = jax.random.split(keys[9], 4)                  # GRUCell(2N -> N), gate order (r, z, n)
    s = 1.0 / jnp.sqrt(N)
    weight_ih = jax.random.uniform(kg[0], (3 * N, 2 * N), jnp.float32, -s, s)
    weight_hh = jax.random.uniform(kg[1], (3 * N, N), jnp.float32, -s, s)
    bias_ih = jax.random.uniform(kg[2], (3 * N,), jnp.float32, -s, s)
    bias_hh = jax.random.uniform(kg[3], (3 * N,), jnp.float32, -s, s)

    pad = jax.random.normal(keys[10], (H - N,), jnp.float32)   # ConcatEmbedding learned padding
    We, be = linear(keys[11], H, L)                            # encoder lift Linear(H -> L)
    A = jax.random.normal(keys[12], (L, L), jnp.float32) * (0.2 / jnp.sqrt(L))  # LinODE kernel

    return dict(dec_layers=dec_layers, enc_layers=enc_layers, Wout=Wout, bout=bout,
                weight_ih=weight_ih, weight_hh=weight_hh, bias_ih=bias_ih, bias_hh=bias_hh,
                pad=pad, We=We, be=be, A=A)


def pack_params(raw):
    f32 = jnp.float32

    # ResNets: decoder layers then encoder layers, transposed for x @ W form.
    res_W = jnp.stack([W.T for (W, _) in raw["dec_layers"] + raw["enc_layers"]])
    res_b = jnp.stack([b for (_, b) in raw["dec_layers"] + raw["enc_layers"]])

    # decoder head + ConcatProjection (keep first N outputs), zero-padded to (L, L).
    W_do = jnp.zeros((L, L), f32).at[:, 0:N].set(raw["Wout"][:N, :].T)
    b_do = jnp.zeros((L,), f32).at[0:N].set(raw["bout"][:N])

    # ConcatEmbedding (learned padding) + encoder lift, padding folded into bias.
    W_enc = jnp.zeros((L, L), f32).at[0:N, :].set(raw["We"][:, :N].T)
    b_enc = raw["pad"] @ raw["We"][:, N:].T + raw["be"]

    misc_W = jnp.stack([W_do, W_enc])
    misc_b = jnp.stack([b_do, b_enc])

    # GRU weights: input rows = [y lanes 0:N | mask lanes N:2N], gates (r|z|n) padded to G lanes.
    gWin = jnp.zeros((L, G), f32)
    gWin = gWin.at[0:N, 0:3 * N].set(raw["weight_ih"][:, 0:N].T)        # y part
    gWin = gWin.at[N:2 * N, 0:3 * N].set(raw["weight_ih"][:, N:2 * N].T)  # mask part
    gWhh = jnp.zeros((L, G), f32).at[0:N, 0:3 * N].set(raw["weight_hh"].T)
    gru_W = jnp.stack([gWin, gWhh])
    gru_b = jnp.zeros((2, G), f32)
    gru_b = gru_b.at[0, 0:3 * N].set(raw["bias_ih"]).at[1, 0:3 * N].set(raw["bias_hh"])

    # Flattened Taylor operator: P[:, (k-1)L:kL) = (A^T)^k / k!, zero-padded to PCOLS lanes.
    A_T = raw["A"].T
    P = jnp.zeros((L, PCOLS), f32)
    M = jnp.eye(L, dtype=f32)
    fact = 1.0
    for k in range(1, TAYLOR_ORDER + 1):
        M = M @ A_T
        fact = fact * k
        P = P.at[:, (k - 1) * L:k * L].set(M / fact)

    return dict(res_W=res_W, res_b=res_b, gru_W=gru_W, gru_b=gru_b,
                misc_W=misc_W, misc_b=misc_b, P=P)


# ---------------------------------------------------------------------------
# Pure-JAX reference built directly from the RAW torch-layout parameters
# (independent of the kernel's packing; exact expm for the system step).
# ---------------------------------------------------------------------------
def reference_step(x_obs, z, dt, raw):
    def resnet(x, layers):
        for blk in range(NUM_BLOCKS):
            (W0, b0), (W1, b1) = layers[2 * blk], layers[2 * blk + 1]
            t = jax.nn.relu(x)
            t = t @ W0.T + b0
            t = jax.nn.relu(t)
            t = t @ W1.T + b1
            x = x + t
        return x

    # projection(decoder(z)): ResNet -> Linear(L->H) head -> keep first N features
    h = resnet(z, raw["dec_layers"])
    x_pre = (h @ raw["Wout"].T + raw["bout"])[:, :N]

    # filter: NaN-impute, concat mask, GRUCell(2N -> N), hidden = x_pre
    mask = jnp.isnan(x_obs)
    y = jnp.where(mask, x_pre, x_obs)
    ym = jnp.concatenate([y, mask.astype(jnp.float32)], axis=-1)
    gi = ym @ raw["weight_ih"].T + raw["bias_ih"]
    gh = x_pre @ raw["weight_hh"].T + raw["bias_hh"]
    r = jax.nn.sigmoid(gi[:, :N] + gh[:, :N])
    u = jax.nn.sigmoid(gi[:, N:2 * N] + gh[:, N:2 * N])
    n = jnp.tanh(gi[:, 2 * N:] + r * gh[:, 2 * N:])
    x_post = (1.0 - u) * n + u * x_pre

    # encoder(embedding(x_post)): ConcatEmbedding pad -> Linear(H->L) lift -> ResNet
    emb = jnp.concatenate(
        [x_post, jnp.broadcast_to(raw["pad"], (x_post.shape[0], H - N))], axis=-1)
    z_post = resnet(emb @ raw["We"].T + raw["be"], raw["enc_layers"])

    # system: exact matrix exponential
    E = jax.vmap(_expm)(dt[:, None, None] * raw["A"][None])
    z_pre = jnp.einsum("bij,bj->bi", E, z_post)
    return z_post, z_pre


def reference_rollout(x_obs_seq, z0, dt_seq, raw):
    z = z0
    z_posts, z_pres = [], []
    for t in range(x_obs_seq.shape[0]):
        zp, zpre = reference_step(x_obs_seq[t], z, dt_seq[t], raw)
        z_posts.append(zp)
        z_pres.append(zpre)
        z = zpre                                  # carry the propagated latent
    return jnp.stack(z_posts), jnp.stack(z_pres)


if __name__ == "__main__":
    key = jax.random.PRNGKey(0)
    kp, kx, km, kz, kd, kxs, kms, kds = jax.random.split(key, 8)

    raw = init_raw_params(kp)
    packed = pack_params(raw)

    # ---- single step (exactly the module's forward) ----
    x_obs = jax.random.normal(kx, (B, N), jnp.float32)
    x_obs = jnp.where(jax.random.bernoulli(km, 0.3, (B, N)), jnp.nan, x_obs)
    z = jax.random.normal(kz, (B, L), jnp.float32)
    dt = jax.random.uniform(kd, (B,), jnp.float32, 0.0, 0.5)

    z_post, z_pre = latent_linode_cell_forward(x_obs, z, dt, packed)
    jax.block_until_ready((z_post, z_pre))

    z_post_ref, z_pre_ref = reference_step(x_obs, z, dt, raw)
    assert z_post.shape == (B, L) and z_pre.shape == (B, L)
    assert bool(jnp.all(jnp.isfinite(z_post))) and bool(jnp.all(jnp.isfinite(z_pre)))
    assert jnp.allclose(z_post, z_post_ref, atol=2e-4, rtol=2e-4), "z_post mismatch vs reference"
    assert jnp.allclose(z_pre, z_pre_ref, atol=2e-4, rtol=2e-4), "z_pre mismatch vs reference"

    # ---- fused multi-step rollout: one pallas_call, weights VMEM-resident ----
    T = 6
    xs = jax.random.normal(kxs, (T, B, N), jnp.float32)
    xs = jnp.where(jax.random.bernoulli(kms, 0.3, (T, B, N)), jnp.nan, xs)
    dts = jax.random.uniform(kds, (T, B), jnp.float32, 0.0, 0.5)

    zp_seq, zpre_seq = latent_linode_cell_rollout(xs, z, dts, packed)
    jax.block_until_ready((zp_seq, zpre_seq))

    zp_ref_seq, zpre_ref_seq = reference_rollout(xs, z, dts, raw)
    assert bool(jnp.all(jnp.isfinite(zp_seq))) and bool(jnp.all(jnp.isfinite(zpre_seq)))
    assert jnp.allclose(zp_seq, zp_ref_seq, atol=1e-3, rtol=1e-3), "rollout z_post mismatch"
    assert jnp.allclose(zpre_seq, zpre_ref_seq, atol=1e-3, rtol=1e-3), "rollout z_pre mismatch"

    print("KERNEL_OK")
</pallas_src>

<mosaic_0001>
module attributes {stable_mosaic.version = 11 : i64} {
  func.func @fused_latent_cell_kernel(%arg0: i32, %arg1: memref<1x8x32xf32, #tpu.memory_space<vmem>>, %arg2: memref<1x8x1xf32, #tpu.memory_space<vmem>>, %arg3: memref<8x32xf32, #tpu.memory_space<vmem>>, %arg4: memref<8x32x32xf32, #tpu.memory_space<vmem>>, %arg5: memref<8x32xf32, #tpu.memory_space<vmem>>, %arg6: memref<2x32x32xf32, #tpu.memory_space<vmem>>, %arg7: memref<2x32xf32, #tpu.memory_space<vmem>>, %arg8: memref<2x32x32xf32, #tpu.memory_space<vmem>>, %arg9: memref<2x32xf32, #tpu.memory_space<vmem>>, %arg10: memref<32x384xf32, #tpu.memory_space<vmem>>, %arg11: memref<1x8x128xf32, #tpu.memory_space<vmem>>, %arg12: memref<8x32xf32, #tpu.memory_space<vmem>>) attributes {dimension_semantics = [#tpu.dimension_semantics<arbitrary>], iteration_bounds = array<i64: 1>, scalar_prefetch = 0 : i64, scratch_operands = 1 : i64, tpu.core_type = #tpu.core_type<tc>, window_params = [{transform_indices = @transform_0, window_bounds = array<i64: 1, 8, 32>}, {transform_indices = @transform_1, window_bounds = array<i64: 1, 8, 1>}, {pipeline_mode = #tpu.pipeline_mode<synchronous>, transform_indices = @transform_2, window_bounds = array<i64: 8, 32>}, {pipeline_mode = #tpu.pipeline_mode<synchronous>, transform_indices = @transform_3, window_bounds = array<i64: 8, 32, 32>}, {pipeline_mode = #tpu.pipeline_mode<synchronous>, transform_indices = @transform_4, window_bounds = array<i64: 8, 32>}, {pipeline_mode = #tpu.pipeline_mode<synchronous>, transform_indices = @transform_5, window_bounds = array<i64: 2, 32, 32>}, {pipeline_mode = #tpu.pipeline_mode<synchronous>, transform_indices = @transform_6, window_bounds = array<i64: 2, 32>}, {pipeline_mode = #tpu.pipeline_mode<synchronous>, transform_indices = @transform_7, window_bounds = array<i64: 2, 32, 32>}, {pipeline_mode = #tpu.pipeline_mode<synchronous>, transform_indices = @transform_8, window_bounds = array<i64: 2, 32>}, {pipeline_mode = #tpu.pipeline_mode<synchronous>, transform_indices = @transform_9, window_bounds = array<i64: 32, 384>}, {transform_indices = @transform_10, window_bounds = array<i64: 1, 8, 128>}]} {
    %c0_i32 = arith.constant 0 : i32
    %0 = arith.cmpi eq, %arg0, %c0_i32 : i32
    %1 = arith.extui %0 : i1 to i32
    %c0_i32_0 = arith.constant 0 : i32
    %2 = arith.cmpi ne, %1, %c0_i32_0 : i32
    scf.if %2 {
      %c0_93 = arith.constant 0 : index
      %c0_94 = arith.constant 0 : index
      %214 = vector.load %arg3[%c0_93, %c0_94] : memref<8x32xf32, #tpu.memory_space<vmem>>, vector<8x32xf32>
      %c0_95 = arith.constant 0 : index
      %c0_96 = arith.constant 0 : index
      %215 = vector.load %arg12[%c0_95, %c0_96] : memref<8x32xf32, #tpu.memory_space<vmem>>, vector<8x32xf32>
      tpu.vector_store %arg12[%c0_95, %c0_96], %214 {strides = array<i32>} : memref<8x32xf32, #tpu.memory_space<vmem>>, vector<8x32xf32>,
    } else {
    }
    %c0 = arith.constant 0 : index
    %c0_1 = arith.constant 0 : index
    %3 = vector.load %arg12[%c0, %c0_1] : memref<8x32xf32, #tpu.memory_space<vmem>>, vector<8x32xf32>
    %cst = arith.constant 0.000000e+00 : f32
    %4 = vector.broadcast %cst : f32 to vector<8x32xf32>
    %5 = arith.maximumf %3, %4 : vector<8x32xf32>
    %c0_2 = arith.constant 0 : index
    %c0_3 = arith.constant 0 : index
    %c0_4 = arith.constant 0 : index
    %6 = vector.load %arg4[%c0_2, %c0_3, %c0_4] : memref<8x32x32xf32, #tpu.memory_space<vmem>>, vector<1x32x32xf32>
    %7 = vector.shape_cast %6 : vector<1x32x32xf32> to vector<32x32xf32>
    %cst_5 = arith.constant dense<0.000000e+00> : vector<8x32xf32>
    %8 = tpu.matmul %5, %7, %cst_5 {dimension_numbers = #tpu.dot_dimension_numbers<[1], [0], [0], [1], [0, 0, 1, 1], [], []>} : vector<8x32xf32>, vector<32x32xf32>, vector<8x32xf32> -> vector<8x32xf32>
    %c0_6 = arith.constant 0 : index
    %c0_7 = arith.constant 0 : index
    %9 = vector.load %arg5[%c0_6, %c0_7] : memref<8x32xf32, #tpu.memory_space<vmem>>, vector<1x32xf32>
    %10 = vector.shape_cast %9 : vector<1x32xf32> to vector<32xf32>
    %11 = vector.shape_cast %10 : vector<32xf32> to vector<1x32xf32>
    %12 = vector.broadcast %11 : vector<1x32xf32> to vector<8x32xf32>
    %13 = arith.addf %8, %12 : vector<8x32xf32>
    %cst_8 = arith.constant 0.000000e+00 : f32
    %14 = vector.broadcast %cst_8 : f32 to vector<8x32xf32>
    %15 = arith.maximumf %13, %14 : vector<8x32xf32>
    %c1 = arith.constant 1 : index
    %c0_9 = arith.constant 0 : index
    %c0_10 = arith.constant 0 : index
    %16 = vector.load %arg4[%c1, %c0_9, %c0_10] : memref<8x32x32xf32, #tpu.memory_space<vmem>>, vector<1x32x32xf32>
    %17 = vector.shape_cast %16 : vector<1x32x32xf32> to vector<32x32xf32>
    %cst_11 = arith.constant dense<0.000000e+00> : vector<8x32xf32>
    %18 = tpu.matmul %15, %17, %cst_11 {dimension_numbers = #tpu.dot_dimension_numbers<[1], [0], [0], [1], [0, 0, 1, 1], [], []>} : vector<8x32xf32>, vector<32x32xf32>, vector<8x32xf32> -> vector<8x32xf32>
    %c1_12 = arith.constant 1 : index
    %c0_13 = arith.constant 0 : index
    %19 = vector.load %arg5[%c1_12, %c0_13] : memref<8x32xf32, #tpu.memory_space<vmem>>, vector<1x32xf32>
    %20 = vector.shape_cast %19 : vector<1x32xf32> to vector<32xf32>
    %21 = vector.shape_cast %20 : vector<32xf32> to vector<1x32xf32>
    %22 = vector.broadcast %21 : vector<1x32xf32> to vector<8x32xf32>
    %23 = arith.addf %18, %22 : vector<8x32xf32>
    %24 = arith.addf %3, %23 : vector<8x32xf32>
    %cst_14 = arith.constant 0.000000e+00 : f32
    %25 = vector.broadcast %cst_14 : f32 to vector<8x32xf32>
    %26 = arith.maximumf %24, %25 : vector<8x32xf32>
    %c2 = arith.constant 2 : index
    %c0_15 = arith.constant 0 : index
    %c0_16 = arith.constant 0 : index
    %27 = vector.load %arg4[%c2, %c0_15, %c0_16] : memref<8x32x32xf32, #tpu.memory_space<vmem>>, vector<1x32x32xf32>
    %28 = vector.shape_cast %27 : vector<1x32x32xf32> to vector<32x32xf32>
    %cst_17 = arith.constant dense<0.000000e+00> : vector<8x32xf32>
    %29 = tpu.matmul %26, %28, %cst_17 {dimension_numbers = #tpu.dot_dimension_numbers<[1], [0], [0], [1], [0, 0, 1, 1], [], []>} : vector<8x32xf32>, vector<32x32xf32>, vector<8x32xf32> -> vector<8x32xf32>
    %c2_18 = arith.constant 2 : index
    %c0_19 = arith.constant 0 : index
    %30 = vector.load %arg5[%c2_18, %c0_19] : memref<8x32xf32, #tpu.memory_space<vmem>>, vector<1x32xf32>
    %31 = vector.shape_cast %30 : vector<1x32xf32> to vector<32xf32>
    %32 = vector.shape_cast %31 : vector<32xf32> to vector<1x32xf32>
    %33 = vector.broadcast %32 : vector<1x32xf32> to vector<8x32xf32>
    %34 = arith.addf %29, %33 : vector<8x32xf32>
    %cst_20 = arith.constant 0.000000e+00 : f32
    %35 = vector.broadcast %cst_20 : f32 to vector<8x32xf32>
    %36 = arith.maximumf %34, %35 : vector<8x32xf32>
    %c3 = arith.constant 3 : index
    %c0_21 = arith.constant 0 : index
    %c0_22 = arith.constant 0 : index
    %37 = vector.load %arg4[%c3, %c0_21, %c0_22] : memref<8x32x32xf32, #tpu.memory_space<vmem>>, vector<1x32x32xf32>
    %38 = vector.shape_cast %37 : vector<1x32x32xf32> to vector<32x32xf32>
    %cst_23 = arith.constant dense<0.000000e+00> : vector<8x32xf32>
    %39 = tpu.matmul %36, %38, %cst_23 {dimension_numbers = #tpu.dot_dimension_numbers<[1], [0], [0], [1], [0, 0, 1, 1], [], []>} : vector<8x32xf32>, vector<32x32xf32>, vector<8x32xf32> -> vector<8x32xf32>
    %c3_24 = arith.constant 3 : index
    %c0_25 = arith.constant 0 : index
    %40 = vector.load %arg5[%c3_24, %c0_25] : memref<8x32xf32, #tpu.memory_space<vmem>>, vector<1x32xf32>
    %41 = vector.shape_cast %40 : vector<1x32xf32> to vector<32xf32>
    %42 = vector.shape_cast %41 : vector<32xf32> to vector<1x32xf32>
    %43 = vector.broadcast %42 : vector<1x32xf32> to vector<8x32xf32>
    %44 = arith.addf %39, %43 : vector<8x32xf32>
    %45 = arith.addf %24, %44 : vector<8x32xf32>
    %c0_26 = arith.constant 0 : index
    %c0_27 = arith.constant 0 : index
    %c0_28 = arith.constant 0 : index
    %46 = vector.load %arg8[%c0_26, %c0_27, %c0_28] : memref<2x32x32xf32, #tpu.memory_space<vmem>>, vector<1x32x32xf32>
    %47 = vector.shape_cast %46 : vector<1x32x32xf32> to vector<32x32xf32>
    %cst_29 = arith.constant dense<0.000000e+00> : vector<8x32xf32>
    %48 = tpu.matmul %45, %47, %cst_29 {dimension_numbers = #tpu.dot_dimension_numbers<[1], [0], [0], [1], [0, 0, 1, 1], [], []>} : vector<8x32xf32>, vector<32x32xf32>, vector<8x32xf32> -> vector<8x32xf32>
    %c0_30 = arith.constant 0 : index
    %c0_31 = arith.constant 0 : index
    %49 = vector.load %arg9[%c0_30, %c0_31] : memref<2x32xf32, #tpu.memory_space<vmem>>, vector<1x32xf32>
    %50 = vector.shape_cast %49 : vector<1x32xf32> to vector<32xf32>
    %51 = vector.shape_cast %50 : vector<32xf32> to vector<1x32xf32>
    %52 = vector.broadcast %51 : vector<1x32xf32> to vector<8x32xf32>
    %53 = arith.addf %48, %52 : vector<8x32xf32>
    %c0_32 = arith.constant 0 : index
    %c0_33 = arith.constant 0 : index
    %c0_34 = arith.constant 0 : index
    %54 = vector.load %arg1[%c0_32, %c0_33, %c0_34] : memref<1x8x32xf32, #tpu.memory_space<vmem>>, vector<1x8x32xf32>
    %55 = vector.shape_cast %54 : vector<1x8x32xf32> to vector<8x32xf32>
    %56 = arith.cmpf one, %55, %55 : vector<8x32xf32>
    %57 = tpu.iota {dimensions = array<i32: 1>} : vector<8x32xi32>
    %58 = arith.select %56, %53, %55 : vector<8x32xi1>, vector<8x32xf32>
    %c8_i32 = arith.constant 8 : i32
    %59 = vector.broadcast %c8_i32 : i32 to vector<8x32xi32>
    %60 = arith.cmpi slt, %57, %59 : vector<8x32xi32>
    %c16_i32 = arith.constant 16 : i32
    %61 = vector.broadcast %c16_i32 : i32 to vector<8x32xi32>
    %62 = arith.cmpi slt, %57, %61 : vector<8x32xi32>
    %63 = arith.extui %56 : vector<8x32xi1> to vector<8x32xi32>
    %64 = arith.sitofp %63 : vector<8x32xi32> to vector<8x32xf32>
    %cst_35 = arith.constant 0.000000e+00 : f32
    %65 = vector.broadcast %cst_35 : f32 to vector<8x32xf32>
    %66 = arith.select %62, %64, %65 : vector<8x32xi1>, vector<8x32xf32>
    %67 = arith.select %60, %58, %66 : vector<8x32xi1>, vector<8x32xf32>
    %c0_36 = arith.constant 0 : index
    %c0_37 = arith.constant 0 : index
    %c0_38 = arith.constant 0 : index
    %68 = vector.load %arg6[%c0_36, %c0_37, %c0_38] : memref<2x32x32xf32, #tpu.memory_space<vmem>>, vector<1x32x32xf32>
    %69 = vector.shape_cast %68 : vector<1x32x32xf32> to vector<32x32xf32>
    %cst_39 = arith.constant dense<0.000000e+00> : vector<8x32xf32>
    %70 = tpu.matmul %67, %69, %cst_39 {dimension_numbers = #tpu.dot_dimension_numbers<[1], [0], [0], [1], [0, 0, 1, 1], [], []>} : vector<8x32xf32>, vector<32x32xf32>, vector<8x32xf32> -> vector<8x32xf32>
    %c0_40 = arith.constant 0 : index
    %c0_41 = arith.constant 0 : index
    %71 = vector.load %arg7[%c0_40, %c0_41] : memref<2x32xf32, #tpu.memory_space<vmem>>, vector<1x32xf32>
    %72 = vector.shape_cast %71 : vector<1x32xf32> to vector<32xf32>
    %73 = vector.shape_cast %72 : vector<32xf32> to vector<1x32xf32>
    %74 = vector.broadcast %73 : vector<1x32xf32> to vector<8x32xf32>
    %75 = arith.addf %70, %74 : vector<8x32xf32>
    %c1_42 = arith.constant 1 : index
    %c0_43 = arith.constant 0 : index
    %c0_44 = arith.constant 0 : index
    %76 = vector.load %arg6[%c1_42, %c0_43, %c0_44] : memref<2x32x32xf32, #tpu.memory_space<vmem>>, vector<1x32x32xf32>
    %77 = vector.shape_cast %76 : vector<1x32x32xf32> to vector<32x32xf32>
    %cst_45 = arith.constant dense<0.000000e+00> : vector<8x32xf32>
    %78 = tpu.matmul %53, %77, %cst_45 {dimension_numbers = #tpu.dot_dimension_numbers<[1], [0], [0], [1], [0, 0, 1, 1], [], []>} : vector<8x32xf32>, vector<32x32xf32>, vector<8x32xf32> -> vector<8x32xf32>
    %c1_46 = arith.constant 1 : index
    %c0_47 = arith.constant 0 : index
    %79 = vector.load %arg7[%c1_46, %c0_47] : memref<2x32xf32, #tpu.memory_space<vmem>>, vector<1x32xf32>
    %80 = vector.shape_cast %79 : vector<1x32xf32> to vector<32xf32>
    %81 = vector.shape_cast %80 : vector<32xf32> to vector<1x32xf32>
    %82 = vector.broadcast %81 : vector<1x32xf32> to vector<8x32xf32>
    %83 = arith.addf %78, %82 : vector<8x32xf32>
    %84 = arith.addf %75, %83 : vector<8x32xf32>
    %85 = arith.negf %84 : vector<8x32xf32>
    %86 = math.exp %85 : vector<8x32xf32>
    %cst_48 = arith.constant 1.000000e+00 : f32
    %87 = vector.broadcast %cst_48 : f32 to vector<8x32xf32>
    %88 = arith.addf %87, %86 : vector<8x32xf32>
    %89 = arith.divf %87, %88 : vector<8x32xf32>
    %90 = vector.extract_strided_slice %89 {offsets = [0, 0], sizes = [8, 8], strides = [1, 1]} : vector<8x32xf32> to vector<8x8xf32>
    %91 = vector.extract_strided_slice %89 {offsets = [0, 8], sizes = [8, 8], strides = [1, 1]} : vector<8x32xf32> to vector<8x8xf32>
    %92 = vector.extract_strided_slice %75 {offsets = [0, 16], sizes = [8, 8], strides = [1, 1]} : vector<8x32xf32> to vector<8x8xf32>
    %93 = vector.extract_strided_slice %83 {offsets = [0, 16], sizes = [8, 8], strides = [1, 1]} : vector<8x32xf32> to vector<8x8xf32>
    %94 = arith.mulf %90, %93 : vector<8x8xf32>
    %95 = arith.addf %92, %94 : vector<8x8xf32>
    %96 = math.tanh %95 : vector<8x8xf32>
    %97 = vector.extract_strided_slice %53 {offsets = [0, 0], sizes = [8, 8], strides = [1, 1]} : vector<8x32xf32> to vector<8x8xf32>
    %cst_49 = arith.constant 1.000000e+00 : f32
    %98 = vector.broadcast %cst_49 : f32 to vector<8x8xf32>
    %99 = arith.subf %98, %91 : vector<8x8xf32>
    %100 = arith.mulf %99, %96 : vector<8x8xf32>
    %101 = arith.mulf %91, %97 : vector<8x8xf32>
    %102 = arith.addf %100, %101 : vector<8x8xf32>
    %cst_50 = arith.constant 0.000000e+00 : f32
    %103 = vector.broadcast %cst_50 : f32 to vector<8x24xf32>
    %104 = tpu.concatenate %102, %103 in 1 : vector<8x8xf32>, vector<8x24xf32> -> vector<8x32xf32>
    %c1_51 = arith.constant 1 : index
    %c0_52 = arith.constant 0 : index
    %c0_53 = arith.constant 0 : index
    %105 = vector.load %arg8[%c1_51, %c0_52, %c0_53] : memref<2x32x32xf32, #tpu.memory_space<vmem>>, vector<1x32x32xf32>
    %106 = vector.shape_cast %105 : vector<1x32x32xf32> to vector<32x32xf32>
    %cst_54 = arith.constant dense<0.000000e+00> : vector<8x32xf32>
    %107 = tpu.matmul %104, %106, %cst_54 {dimension_numbers = #tpu.dot_dimension_numbers<[1], [0], [0], [1], [0, 0, 1, 1], [], []>} : vector<8x32xf32>, vector<32x32xf32>, vector<8x32xf32> -> vector<8x32xf32>
    %c1_55 = arith.constant 1 : index
    %c0_56 = arith.constant 0 : index
    %108 = vector.load %arg9[%c1_55, %c0_56] : memref<2x32xf32, #tpu.memory_space<vmem>>, vector<1x32xf32>
    %109 = vector.shape_cast %108 : vector<1x32xf32> to vector<32xf32>
    %110 = vector.shape_cast %109 : vector<32xf32> to vector<1x32xf32>
    %111 = vector.broadcast %110 : vector<1x32xf32> to vector<8x32xf32>
    %112 = arith.addf %107, %111 : vector<8x32xf32>
    %cst_57 = arith.constant 0.000000e+00 : f32
    %113 = vector.broadcast %cst_57 : f32 to vector<8x32xf32>
    %114 = arith.maximumf %112, %113 : vector<8x32xf32>
    %c4 = arith.constant 4 : index
    %c0_58 = arith.constant 0 : index
    %c0_59 = arith.constant 0 : index
    %115 = vector.load %arg4[%c4, %c0_58, %c0_59] : memref<8x32x32xf32, #tpu.memory_space<vmem>>, vector<1x32x32xf32>
    %116 = vector.shape_cast %115 : vector<1x32x32xf32> to vector<32x32xf32>
    %cst_60 = arith.constant dense<0.000000e+00> : vector<8x32xf32>
    %117 = tpu.matmul %114, %116, %cst_60 {dimension_numbers = #tpu.dot_dimension_numbers<[1], [0], [0], [1], [0, 0, 1, 1], [], []>} : vector<8x32xf32>, vector<32x32xf32>, vector<8x32xf32> -> vector<8x32xf32>
    %c4_61 = arith.constant 4 : index
    %c0_62 = arith.constant 0 : index
    %118 = vector.load %arg5[%c4_61, %c0_62] : memref<8x32xf32, #tpu.memory_space<vmem>>, vector<1x32xf32>
    %119 = vector.shape_cast %118 : vector<1x32xf32> to vector<32xf32>
    %120 = vector.shape_cast %119 : vector<32xf32> to vector<1x32xf32>
    %121 = vector.broadcast %120 : vector<1x32xf32> to vector<8x32xf32>
    %122 = arith.addf %117, %121 : vector<8x32xf32>
    %cst_63 = arith.constant 0.000000e+00 : f32
    %123 = vector.broadcast %cst_63 : f32 to vector<8x32xf32>
    %124 = arith.maximumf %122, %123 : vector<8x32xf32>
    %c5 = arith.constant 5 : index
    %c0_64 = arith.constant 0 : index
    %c0_65 = arith.constant 0 : index
    %125 = vector.load %arg4[%c5, %c0_64, %c0_65] : memref<8x32x32xf32, #tpu.memory_space<vmem>>, vector<1x32x32xf32>
    %126 = vector.shape_cast %125 : vector<1x32x32xf32> to vector<32x32xf32>
    %cst_66 = arith.constant dense<0.000000e+00> : vector<8x32xf32>
    %127 = tpu.matmul %124, %126, %cst_66 {dimension_numbers = #tpu.dot_dimension_numbers<[1], [0], [0], [1], [0, 0, 1, 1], [], []>} : vector<8x32xf32>, vector<32x32xf32>, vector<8x32xf32> -> vector<8x32xf32>
    %c5_67 = arith.constant 5 : index
    %c0_68 = arith.constant 0 : index
    %128 = vector.load %arg5[%c5_67, %c0_68] : memref<8x32xf32, #tpu.memory_space<vmem>>, vector<1x32xf32>
    %129 = vector.shape_cast %128 : vector<1x32xf32> to vector<32xf32>
    %130 = vector.shape_cast %129 : vector<32xf32> to vector<1x32xf32>
    %131 = vector.broadcast %130 : vector<1x32xf32> to vector<8x32xf32>
    %132 = arith.addf %127, %131 : vector<8x32xf32>
    %133 = arith.addf %112, %132 : vector<8x32xf32>
    %cst_69 = arith.constant 0.000000e+00 : f32
    %134 = vector.broadcast %cst_69 : f32 to vector<8x32xf32>
    %135 = arith.maximumf %133, %134 : vector<8x32xf32>
    %c6 = arith.constant 6 : index
    %c0_70 = arith.constant 0 : index
    %c0_71 = arith.constant 0 : index
    %136 = vector.load %arg4[%c6, %c0_70, %c0_71] : memref<8x32x32xf32, #tpu.memory_space<vmem>>, vector<1x32x32xf32>
    %137 = vector.shape_cast %136 : vector<1x32x32xf32> to vector<32x32xf32>
    %cst_72 = arith.constant dense<0.000000e+00> : vector<8x32xf32>
    %138 = tpu.matmul %135, %137, %cst_72 {dimension_numbers = #tpu.dot_dimension_numbers<[1], [0], [0], [1], [0, 0, 1, 1], [], []>} : vector<8x32xf32>, vector<32x32xf32>, vector<8x32xf32> -> vector<8x32xf32>
    %c6_73 = arith.constant 6 : index
    %c0_74 = arith.constant 0 : index
    %139 = vector.load %arg5[%c6_73, %c0_74] : memref<8x32xf32, #tpu.memory_space<vmem>>, vector<1x32xf32>
    %140 = vector.shape_cast %139 : vector<1x32xf32> to vector<32xf32>
    %141 = vector.shape_cast %140 : vector<32xf32> to vector<1x32xf32>
    %142 = vector.broadcast %141 : vector<1x32xf32> to vector<8x32xf32>
    %143 = arith.addf %138, %142 : vector<8x32xf32>
    %cst_75 = arith.constant 0.000000e+00 : f32
    %144 = vector.broadcast %cst_75 : f32 to vector<8x32xf32>
    %145 = arith.maximumf %143, %144 : vector<8x32xf32>
    %c7 = arith.constant 7 : index
    %c0_76 = arith.constant 0 : index
    %c0_77 = arith.constant 0 : index
    %146 = vector.load %arg4[%c7, %c0_76, %c0_77] : memref<8x32x32xf32, #tpu.memory_space<vmem>>, vector<1x32x32xf32>
    %147 = vector.shape_cast %146 : vector<1x32x32xf32> to vector<32x32xf32>
    %cst_78 = arith.constant dense<0.000000e+00> : vector<8x32xf32>
    %148 = tpu.matmul %145, %147, %cst_78 {dimension_numbers = #tpu.dot_dimension_numbers<[1], [0], [0], [1], [0, 0, 1, 1], [], []>} : vector<8x32xf32>, vector<32x32xf32>, vector<8x32xf32> -> vector<8x32xf32>
    %c7_79 = arith.constant 7 : index
    %c0_80 = arith.constant 0 : index
    %149 = vector.load %arg5[%c7_79, %c0_80] : memref<8x32xf32, #tpu.memory_space<vmem>>, vector<1x32xf32>
    %150 = vector.shape_cast %149 : vector<1x32xf32> to vector<32xf32>
    %151 = vector.shape_cast %150 : vector<32xf32> to vector<1x32xf32>
    %152 = vector.broadcast %151 : vector<1x32xf32> to vector<8x32xf32>
    %153 = arith.addf %148, %152 : vector<8x32xf32>
    %154 = arith.addf %133, %153 : vector<8x32xf32>
    %c0_81 = arith.constant 0 : index
    %c0_82 = arith.constant 0 : index
    %155 = vector.load %arg10[%c0_81, %c0_82] : memref<32x384xf32, #tpu.memory_space<vmem>>, vector<32x384xf32>
    %cst_83 = arith.constant dense<0.000000e+00> : vector<8x384xf32>
    %156 = tpu.matmul %154, %155, %cst_83 {dimension_numbers = #tpu.dot_dimension_numbers<[1], [0], [0], [1], [0, 0, 1, 1], [], []>} : vector<8x32xf32>, vector<32x384xf32>, vector<8x384xf32> -> vector<8x384xf32>
    %c0_84 = arith.constant 0 : index
    %c0_85 = arith.constant 0 : index
    %c0_86 = arith.constant 0 : index
    %157 = vector.load %arg2[%c0_84, %c0_85, %c0_86] : memref<1x8x1xf32, #tpu.memory_space<vmem>>, vector<1x8x1xf32>
    %158 = vector.shape_cast %157 : vector<1x8x1xf32> to vector<8x1xf32>
    %159 = vector.extract_strided_slice %156 {offsets = [0, 0], sizes = [8, 32], strides = [1, 1]} : vector<8x384xf32> to vector<8x32xf32>
    %160 = vector.broadcast %158 : vector<8x1xf32> to vector<8x32xf32>
    %161 = arith.mulf %160, %159 : vector<8x32xf32>
    %162 = arith.addf %154, %161 : vector<8x32xf32>
    %163 = arith.mulf %158, %158 : vector<8x1xf32>
    %164 = vector.extract_strided_slice %156 {offsets = [0, 32], sizes = [8, 32], strides = [1, 1]} : vector<8x384xf32> to vector<8x32xf32>
    %165 = vector.broadcast %163 : vector<8x1xf32> to vector<8x32xf32>
    %166 = arith.mulf %165, %164 : vector<8x32xf32>
    %167 = arith.addf %162, %166 : vector<8x32xf32>
    %168 = arith.mulf %163, %158 : vector<8x1xf32>
    %169 = vector.extract_strided_slice %156 {offsets = [0, 64], sizes = [8, 32], strides = [1, 1]} : vector<8x384xf32> to vector<8x32xf32>
    %170 = vector.broadcast %168 : vector<8x1xf32> to vector<8x32xf32>
    %171 = arith.mulf %170, %169 : vector<8x32xf32>
    %172 = arith.addf %167, %171 : vector<8x32xf32>
    %173 = arith.mulf %168, %158 : vector<8x1xf32>
    %174 = vector.extract_strided_slice %156 {offsets = [0, 96], sizes = [8, 32], strides = [1, 1]} : vector<8x384xf32> to vector<8x32xf32>
    %175 = vector.broadcast %173 : vector<8x1xf32> to vector<8x32xf32>
    %176 = arith.mulf %175, %174 : vector<8x32xf32>
    %177 = arith.addf %172, %176 : vector<8x32xf32>
    %178 = arith.mulf %173, %158 : vector<8x1xf32>
    %179 = vector.extract_strided_slice %156 {offsets = [0, 128], sizes = [8, 32], strides = [1, 1]} : vector<8x384xf32> to vector<8x32xf32>
    %180 = vector.broadcast %178 : vector<8x1xf32> to vector<8x32xf32>
    %181 = arith.mulf %180, %179 : vector<8x32xf32>
    %182 = arith.addf %177, %181 : vector<8x32xf32>
    %183 = arith.mulf %178, %158 : vector<8x1xf32>
    %184 = vector.extract_strided_slice %156 {offsets = [0, 160], sizes = [8, 32], strides = [1, 1]} : vector<8x384xf32> to vector<8x32xf32>
    %185 = vector.broadcast %183 : vector<8x1xf32> to vector<8x32xf32>
    %186 = arith.mulf %185, %184 : vector<8x32xf32>
    %187 = arith.addf %182, %186 : vector<8x32xf32>
    %188 = arith.mulf %183, %158 : vector<8x1xf32>
    %189 = vector.extract_strided_slice %156 {offsets = [0, 192], sizes = [8, 32], strides = [1, 1]} : vector<8x384xf32> to vector<8x32xf32>
    %190 = vector.broadcast %188 : vector<8x1xf32> to vector<8x32xf32>
    %191 = arith.mulf %190, %189 : vector<8x32xf32>
    %192 = arith.addf %187, %191 : vector<8x32xf32>
    %193 = arith.mulf %188, %158 : vector<8x1xf32>
    %194 = vector.extract_strided_slice %156 {offsets = [0, 224], sizes = [8, 32], strides = [1, 1]} : vector<8x384xf32> to vector<8x32xf32>
    %195 = vector.broadcast %193 : vector<8x1xf32> to vector<8x32xf32>
    %196 = arith.mulf %195, %194 : vector<8x32xf32>
    %197 = arith.addf %192, %196 : vector<8x32xf32>
    %198 = arith.mulf %193, %158 : vector<8x1xf32>
    %199 = vector.extract_strided_slice %156 {offsets = [0, 256], sizes = [8, 32], strides = [1, 1]} : vector<8x384xf32> to vector<8x32xf32>
    %200 = vector.broadcast %198 : vector<8x1xf32> to vector<8x32xf32>
    %201 = arith.mulf %200, %199 : vector<8x32xf32>
    %202 = arith.addf %197, %201 : vector<8x32xf32>
    %203 = arith.mulf %198, %158 : vector<8x1xf32>
    %204 = vector.extract_strided_slice %156 {offsets = [0, 288], sizes = [8, 32], strides = [1, 1]} : vector<8x384xf32> to vector<8x32xf32>
    %205 = vector.broadcast %203 : vector<8x1xf32> to vector<8x32xf32>
    %206 = arith.mulf %205, %204 : vector<8x32xf32>
    %207 = arith.addf %202, %206 : vector<8x32xf32>
    %c0_87 = arith.constant 0 : index
    %c0_88 = arith.constant 0 : index
    %208 = vector.load %arg12[%c0_87, %c0_88] : memref<8x32xf32, #tpu.memory_space<vmem>>, vector<8x32xf32>
    tpu.vector_store %arg12[%c0_87, %c0_88], %207 {strides = array<i32>} : memref<8x32xf32, #tpu.memory_space<vmem>>, vector<8x32xf32>,
    %cst_89 = arith.constant 0.000000e+00 : f32
    %209 = vector.broadcast %cst_89 : f32 to vector<8x64xf32>
    %210 = tpu.concatenate %154, %207, %209 in 1 : vector<8x32xf32>, vector<8x32xf32>, vector<8x64xf32> -> vector<8x128xf32>
    %c0_90 = arith.constant 0 : index
    %c0_91 = arith.constant 0 : index
    %c0_92 = arith.constant 0 : index
    %211 = vector.load %arg11[%c0_90, %c0_91, %c0_92] : memref<1x8x128xf32, #tpu.memory_space<vmem>>, vector<1x8x128xf32>
    %212 = vector.shape_cast %211 : vector<1x8x128xf32> to vector<8x128xf32>
    %213 = vector.shape_cast %210 : vector<8x128xf32> to vector<1x8x128xf32>
    tpu.vector_store %arg11[%c0_90, %c0_91, %c0_92], %213 {strides = array<i32>} : memref<1x8x128xf32, #tpu.memory_space<vmem>>, vector<1x8x128xf32>,
    return
  }
  func.func @transform_0(%arg0: i32) -> (i32, i32, i32) {
    %c0_i32 = arith.constant 0 : i32
    %c0_i32_0 = arith.constant 0 : i32
    %c0_i32_1 = arith.constant 0 : i32
    return %arg0, %c0_i32, %c0_i32_0 : i32, i32, i32
  }
  func.func @transform_1(%arg0: i32) -> (i32, i32, i32) {
    %c0_i32 = arith.constant 0 : i32
    %c0_i32_0 = arith.constant 0 : i32
    %c0_i32_1 = arith.constant 0 : i32
    return %arg0, %c0_i32, %c0_i32_0 : i32, i32, i32
  }
  func.func @transform_2(%arg0: i32) -> (i32, i32) {
    %c0_i32 = arith.constant 0 : i32
    %c0_i32_0 = arith.constant 0 : i32
    %c0_i32_1 = arith.constant 0 : i32
    return %c0_i32, %c0_i32_0 : i32, i32
  }
  func.func @transform_3(%arg0: i32) -> (i32, i32, i32) {
    %c0_i32 = arith.constant 0 : i32
    %c0_i32_0 = arith.constant 0 : i32
    %c0_i32_1 = arith.constant 0 : i32
    %c0_i32_2 = arith.constant 0 : i32
    return %c0_i32, %c0_i32_0, %c0_i32_1 : i32, i32, i32
  }
  func.func @transform_4(%arg0: i32) -> (i32, i32) {
    %c0_i32 = arith.constant 0 : i32
    %c0_i32_0 = arith.constant 0 : i32
    %c0_i32_1 = arith.constant 0 : i32
    return %c0_i32, %c0_i32_0 : i32, i32
  }
  func.func @transform_5(%arg0: i32) -> (i32, i32, i32) {
    %c0_i32 = arith.constant 0 : i32
    %c0_i32_0 = arith.constant 0 : i32
    %c0_i32_1 = arith.constant 0 : i32
    %c0_i32_2 = arith.constant 0 : i32
    return %c0_i32, %c0_i32_0, %c0_i32_1 : i32, i32, i32
  }
  func.func @transform_6(%arg0: i32) -> (i32, i32) {
    %c0_i32 = arith.constant 0 : i32
    %c0_i32_0 = arith.constant 0 : i32
    %c0_i32_1 = arith.constant 0 : i32
    return %c0_i32, %c0_i32_0 : i32, i32
  }
  func.func @transform_7(%arg0: i32) -> (i32, i32, i32) {
    %c0_i32 = arith.constant 0 : i32
    %c0_i32_0 = arith.constant 0 : i32
    %c0_i32_1 = arith.constant 0 : i32
    %c0_i32_2 = arith.constant 0 : i32
    return %c0_i32, %c0_i32_0, %c0_i32_1 : i32, i32, i32
  }
  func.func @transform_8(%arg0: i32) -> (i32, i32) {
    %c0_i32 = arith.constant 0 : i32
    %c0_i32_0 = arith.constant 0 : i32
    %c0_i32_1 = arith.constant 0 : i32
    return %c0_i32, %c0_i32_0 : i32, i32
  }
  func.func @transform_9(%arg0: i32) -> (i32, i32) {
    %c0_i32 = arith.constant 0 : i32
    %c0_i32_0 = arith.constant 0 : i32
    %c0_i32_1 = arith.constant 0 : i32
    return %c0_i32, %c0_i32_0 : i32, i32
  }
  func.func @transform_10(%arg0: i32) -> (i32, i32, i32) {
    %c0_i32 = arith.constant 0 : i32
    %c0_i32_0 = arith.constant 0 : i32
    %c0_i32_1 = arith.constant 0 : i32
    return %arg0, %c0_i32, %c0_i32_0 : i32, i32, i32
  }
}

</mosaic_0001>

<llo_original>
// kernel: tpu_custom_call.1
$region0: #{tpu_custom_call.1}
  #allocation0 [shape = 'u32[]', space=smem, size = 0x4, offset = 0x4, fixed_abs, tag = 'smem constant byte address 0x4 - core index']
  #allocation1 [shape = 'u32[72,128]{1,0:T(1,128)}', space=vmem, size = 0x9000, scoped, tag = 'internal scratch']
  #allocation2 [shape = 'f32[8,32]{1,0:T(8,128)}', space=vmem, size = 0x1000, scoped, tag = 'scratch operand']
  %s0 = inlined_call_operand.vmem [shape: f32[1,8,32], index: 0, kind: input, shape index: {}]
  %s1 = inlined_call_operand.vmem [shape: f32[1,8,1], index: 1, kind: input, shape index: {}]
  %s2 = inlined_call_operand.hbm [shape: f32[8,32], index: 2, kind: input, shape index: {}]
  %s3 = inlined_call_operand.hbm [shape: f32[8,32,32], index: 3, kind: input, shape index: {}]
  %s4 = inlined_call_operand.hbm [shape: f32[8,32], index: 4, kind: input, shape index: {}]
  %s5 = inlined_call_operand.hbm [shape: f32[2,32,32], index: 5, kind: input, shape index: {}]
  %s6 = inlined_call_operand.vmem [shape: f32[2,32], index: 6, kind: input, shape index: {}]
  %s7 = inlined_call_operand.hbm [shape: f32[2,32,32], index: 7, kind: input, shape index: {}]
  %s8 = inlined_call_operand.vmem [shape: f32[2,32], index: 8, kind: input, shape index: {}]
  %s9 = inlined_call_operand.hbm [shape: f32[32,384], index: 9, kind: input, shape index: {}]
  %s10 = inlined_call_operand.hbm [shape: f32[1,8,128], index: 10, kind: output, shape index: {}]
  %s11 = sld [smem:[#allocation0]]
  $region78: #{tpu_custom_call.1} parent=0
    _
  %s13 = ssub.s32 1, %s11
  %s14 = scalar_select 0, %s13, %s11
  $region1: #{tpu_custom_call.1} parent=0
    #allocation3 [shape = 'u8[4096]{0}', space=vmem, size = 0x1000, scoped, tag = 'input window, operand 2, single buffered']
    #allocation4 [shape = 's32[1]{0}', space=sflag, size = 0x4, scoped, tag = 'scoped memory for tpu_custom_call.1']
    #allocation5 [shape = 's32[1]{0}', space=sflag, size = 0x4, scoped, tag = 'scoped memory for tpu_custom_call.1']
    #allocation6 [shape = 'u8[131072]{0}', space=vmem, size = 0x20000, scoped, tag = 'input window, operand 3, single buffered']
    #allocation7 [shape = 's32[1]{0}', space=sflag, size = 0x4, scoped, tag = 'scoped memory for tpu_custom_call.1']
    #allocation8 [shape = 'u8[4096]{0}', space=vmem, size = 0x1000, scoped, tag = 'input window, operand 4, single buffered']
    #allocation9 [shape = 'u8[32768]{0}', space=vmem, size = 0x8000, scoped, tag = 'input window, operand 5, single buffered']
    #allocation10 [shape = 's32[1]{0}', space=sflag, size = 0x4, scoped, tag = 'scoped memory for tpu_custom_call.1']
    #allocation11 [shape = 'u8[32768]{0}', space=vmem, size = 0x8000, scoped, tag = 'input window, operand 7, single buffered']
    #allocation12 [shape = 'u8[49152]{0}', space=vmem, size = 0xc000, scoped, tag = 'input window, operand 9, single buffered']
    #allocation13 [shape = 's32[1]{0}', space=sflag, size = 0x4, scoped, tag = 'scoped memory for tpu_custom_call.1']
    #allocation14 [shape = 'u8[4096]{0}', space=vmem, size = 0x1000, scoped, tag = 'output window, operand 0, single buffered']
    %15 = vsyncpa [#allocation4], 0
    %16 = vsyncpa [#allocation7], 0
    %17 = vsyncpa [#allocation10], 0
    %18 = vsyncpa [#allocation13], 0
    %19 = vsyncpa [#allocation5], 0
    // Predicated region
    $region2: #{tpu_custom_call.1} parent=1 // pred_check
      _
    $region3: #{tpu_custom_call.1} parent=1 // pred_check_branch
      %21 = sbr.rel (0) target = $region5
    $region4: #{tpu_custom_call.1} parent=1 // pred_region
      _
    $region5: #{tpu_custom_call.1} parent=1 // pred_fallthru
      _
    // Predicated region
    $region6: #{tpu_custom_call.1} parent=1 // pred_check
      _
    $region7: #{tpu_custom_call.1} parent=1 // pred_check_branch
      %23 = sbr.rel (0) target = $region9
    $region8: #{tpu_custom_call.1} parent=1 // pred_region
      _
    $region9: #{tpu_custom_call.1} parent=1 // pred_fallthru
      _
    // Predicated region
    $region10: #{tpu_custom_call.1} parent=1 // pred_check
      _
    $region11: #{tpu_custom_call.1} parent=1 // pred_check_branch
      %25 = sbr.rel (0) target = $region13
    $region12: #{tpu_custom_call.1} parent=1 // pred_region
      %27 = vsyncadd [#allocation4], 0
      %s29 = sshll.u32 %s2, 4
      %s30 = int_to_ptr.hbm [resolvable:$true] %s29
      %s31 = sshll.u32 [#allocation3], 4
      %s32 = int_to_ptr.vmem [resolvable:$true] %s31
      %34 = dma.hbm_to_vmem [thread:$0]  %s30, 128, %s32, [#allocation4]
    $region13: #{tpu_custom_call.1} parent=1 // pred_fallthru
      _
    // Predicated region
    $region14: #{tpu_custom_call.1} parent=1 // pred_check
      _
    $region15: #{tpu_custom_call.1} parent=1 // pred_check_branch
      %36 = sbr.rel (0) target = $region17
    $region16: #{tpu_custom_call.1} parent=1 // pred_region
      %38 = vsyncadd [#allocation7], 0
      %s39 = sshll.u32 %s3, 4
      %s40 = int_to_ptr.hbm [resolvable:$true] %s39
      %s41 = sshll.u32 [#allocation6], 4
      %s42 = int_to_ptr.vmem [resolvable:$true] %s41
      %47 = dma.hbm_to_vmem [thread:$0]  %s40, 4096, %s42, [#allocation7], 128, 128, 8
    $region17: #{tpu_custom_call.1} parent=1 // pred_fallthru
      _
    // Predicated region
    $region18: #{tpu_custom_call.1} parent=1 // pred_check
      _
    $region19: #{tpu_custom_call.1} parent=1 // pred_check_branch
      %49 = sbr.rel (0) target = $region21
    $region20: #{tpu_custom_call.1} parent=1 // pred_region
      %51 = vsyncadd [#allocation7], 0
      %s53 = sshll.u32 %s4, 4
      %s54 = int_to_ptr.hbm [resolvable:$true] %s53
      %s55 = sshll.u32 [#allocation8], 4
      %s56 = int_to_ptr.vmem [resolvable:$true] %s55
      %58 = dma.hbm_to_vmem [thread:$0]  %s54, 128, %s56, [#allocation7]
    $region21: #{tpu_custom_call.1} parent=1 // pred_fallthru
      _
    // Predicated region
    $region22: #{tpu_custom_call.1} parent=1 // pred_check
      _
    $region23: #{tpu_custom_call.1} parent=1 // pred_check_branch
      %60 = sbr.rel (0) target = $region25
    $region24: #{tpu_custom_call.1} parent=1 // pred_region
      %62 = vsyncadd [#allocation10], 0
      %s63 = sshll.u32 %s5, 4
      %s64 = int_to_ptr.hbm [resolvable:$true] %s63
      %s65 = sshll.u32 [#allocation9], 4
      %s66 = int_to_ptr.vmem [resolvable:$true] %s65
      %71 = dma.hbm_to_vmem [thread:$0]  %s64, 1024, %s66, [#allocation10], 128, 128, 8
    $region25: #{tpu_custom_call.1} parent=1 // pred_fallthru
      _
    // Predicated region
    $region26: #{tpu_custom_call.1} parent=1 // pred_check
      _
    $region27: #{tpu_custom_call.1} parent=1 // pred_check_branch
      %73 = sbr.rel (0) target = $region29
    $region28: #{tpu_custom_call.1} parent=1 // pred_region
      _
    $region29: #{tpu_custom_call.1} parent=1 // pred_fallthru
      _
    // Predicated region
    $region30: #{tpu_custom_call.1} parent=1 // pred_check
      _
    $region31: #{tpu_custom_call.1} parent=1 // pred_check_branch
      %75 = sbr.rel (0) target = $region33
    $region32: #{tpu_custom_call.1} parent=1 // pred_region
      %77 = vsyncadd [#allocation10], 0
      %s78 = sshll.u32 %s7, 4
      %s79 = int_to_ptr.hbm [resolvable:$true] %s78
      %s80 = sshll.u32 [#allocation11], 4
      %s81 = int_to_ptr.vmem [resolvable:$true] %s80
      %86 = dma.hbm_to_vmem [thread:$0]  %s79, 1024, %s81, [#allocation10], 128, 128, 8
    $region33: #{tpu_custom_call.1} parent=1 // pred_fallthru
      _
    // Predicated region
    $region34: #{tpu_custom_call.1} parent=1 // pred_check
      _
    $region35: #{tpu_custom_call.1} parent=1 // pred_check_branch
      %88 = sbr.rel (0) target = $region37
    $region36: #{tpu_custom_call.1} parent=1 // pred_region
      _
    $region37: #{tpu_custom_call.1} parent=1 // pred_fallthru
      _
    // Predicated region
    $region38: #{tpu_custom_call.1} parent=1 // pred_check
      _
    $region39: #{tpu_custom_call.1} parent=1 // pred_check_branch
      %90 = sbr.rel (0) target = $region41
    $region40: #{tpu_custom_call.1} parent=1 // pred_region
      %92 = vsyncadd [#allocation13], 0
      %s93 = sshll.u32 %s9, 4
      %s94 = int_to_ptr.hbm [resolvable:$true] %s93
      %s95 = sshll.u32 [#allocation12], 4
      %s96 = int_to_ptr.vmem [resolvable:$true] %s95
      %101 = dma.hbm_to_vmem [thread:$0]  %s94, 1536, %s96, [#allocation13], 384, 384, 24
    $region41: #{tpu_custom_call.1} parent=1 // pred_fallthru
      _
    // Predicated region
    $region42: #{tpu_custom_call.1} parent=1 // pred_check
      _
    $region43: #{tpu_custom_call.1} parent=1 // pred_check_branch
      %103 = sbr.rel (0) target = $region45
    $region44: #{tpu_custom_call.1} parent=1 // pred_region
      %105 = dma.done [#allocation4], 128
    $region45: #{tpu_custom_call.1} parent=1 // pred_fallthru
      _
    // Predicated region
    $region46: #{tpu_custom_call.1} parent=1 // pred_check
      _
    $region47: #{tpu_custom_call.1} parent=1 // pred_check_branch
      %107 = sbr.rel (0) target = $region49
    $region48: #{tpu_custom_call.1} parent=1 // pred_region
      %109 = dma.done [#allocation7], 4096
    $region49: #{tpu_custom_call.1} parent=1 // pred_fallthru
      _
    // Predicated region
    $region50: #{tpu_custom_call.1} parent=1 // pred_check
      _
    $region51: #{tpu_custom_call.1} parent=1 // pred_check_branch
      %111 = sbr.rel (0) target = $region53
    $region52: #{tpu_custom_call.1} parent=1 // pred_region
      %113 = dma.done [#allocation7], 128
    $region53: #{tpu_custom_call.1} parent=1 // pred_fallthru
      _
    // Predicated region
    $region54: #{tpu_custom_call.1} parent=1 // pred_check
      _
    $region55: #{tpu_custom_call.1} parent=1 // pred_check_branch
      %115 = sbr.rel (0) target = $region57
    $region56: #{tpu_custom_call.1} parent=1 // pred_region
      %117 = dma.done [#allocation10], 1024
    $region57: #{tpu_custom_call.1} parent=1 // pred_fallthru
      _
    // Predicated region
    $region58: #{tpu_custom_call.1} parent=1 // pred_check
      _
    $region59: #{tpu_custom_call.1} parent=1 // pred_check_branch
      %119 = sbr.rel (0) target = $region61
    $region60: #{tpu_custom_call.1} parent=1 // pred_region
      %121 = dma.done [#allocation10], 1024
    $region61: #{tpu_custom_call.1} parent=1 // pred_fallthru
      _
    // Predicated region
    $region62: #{tpu_custom_call.1} parent=1 // pred_check
      _
    $region63: #{tpu_custom_call.1} parent=1 // pred_check_branch
      %123 = sbr.rel (0) target = $region65
    $region64: #{tpu_custom_call.1} parent=1 // pred_region
      %125 = dma.done [#allocation13], 1536
    $region65: #{tpu_custom_call.1} parent=1 // pred_fallthru
      _
    %p126 = scmp.eq.s32.totalorder 0, 0
    // Predicated region
    $region66: #{tpu_custom_call.1} parent=1 // pred_check
      %p127 = pneg %p126
    $region67: #{tpu_custom_call.1} parent=1 // pred_check_branch
      %129 = sbr.rel (%p127) target = $region69
    $region68: #{tpu_custom_call.1} parent=1 // pred_region
      %v130 = vld [vmem:[#allocation3] sm:$0xff]
      %vm131 = vcmask 261120
      %132 = vst.msk [vmem:[#allocation2] sm:$0xff] %vm131, %v130
    $region69: #{tpu_custom_call.1} parent=1 // pred_fallthru
      _
    %v133 = vld [vmem:[#allocation2] sm:$0xff]
    %v134 = vmax.f32 %v133, 0.0
    %v135 = vld [vmem:[#allocation6] sm:$0xff]
    %v136 = vld [vmem:[#allocation6 + $0x8] sm:$0xff]
    %v137 = vld [vmem:[#allocation6 + $0x10] sm:$0xff]
    %v138 = vld [vmem:[#allocation6 + $0x18] sm:$0xff]
    %v139 = vld [vmem:[#allocation8] sm:$0x1]
    %v140 = vperm.slane %v139, 0
    %vm141 = vcmask 261120
    %v143 = vsel %vm141, %v134, 0
    %145 = vmatpush.msra.mxu0 0.0
    %146 = vmatpush.msra.mxu0 0.0
    %147 = vmatpush.msra.mxu0 0.0
    %148 = vmatpush.msra.mxu0 0.0
    %149 = vmatpush.msra.mxu0 0.0
    %150 = vmatpush.msra.mxu0 0.0
    %151 = vmatpush.msra.mxu0 0.0
    %152 = vmatpush.msra.mxu0 0.0
    %153 = vmatpush.msra.mxu0 0.0
    %154 = vmatpush.msra.mxu0 0.0
    %155 = vmatpush.msra.mxu0 0.0
    %156 = vmatpush.msra.mxu0 0.0
    %157 = vmatpush.msra.mxu0 %v138
    %158 = vmatpush.msra.mxu0 %v137
    %159 = vmatpush.msra.mxu0 %v136
    %160 = vmatpush.msra.mxu0 %v135
    %161 = vmatmul.f32.gmra.mxu0 %v143
    %v162 = vpop.f32.mrf.mxu0
    %v163 = vadd.f32 %v140, %v162
    %164 = vdwg.mxu0
    %v165 = vmax.f32 %v163, 0.0
    %s166 = scalar_lea.vmem [#allocation6], 32
    %v167 = vld [vmem:[%s166] sm:$0xff]
    %v168 = vld [vmem:[%s166 + $0x8] sm:$0xff]
    %v169 = vld [vmem:[%s166 + $0x10] sm:$0xff]
    %v170 = vld [vmem:[%s166 + $0x18] sm:$0xff]
    %v171 = vld [vmem:[#allocation8 + $0x1] sm:$0x1]
    %v172 = vperm.slane %v171, 0
    %v174 = vsel %vm141, %v165, 0
    %176 = vmatpush.msra.mxu0 0.0
    %177 = vmatpush.msra.mxu0 0.0
    %178 = vmatpush.msra.mxu0 0.0
    %179 = vmatpush.msra.mxu0 0.0
    %180 = vmatpush.msra.mxu0 0.0
    %181 = vmatpush.msra.mxu0 0.0
    %182 = vmatpush.msra.mxu0 0.0
    %183 = vmatpush.msra.mxu0 0.0
    %184 = vmatpush.msra.mxu0 0.0
    %185 = vmatpush.msra.mxu0 0.0
    %186 = vmatpush.msra.mxu0 0.0
    %187 = vmatpush.msra.mxu0 0.0
    %188 = vmatpush.msra.mxu0 %v170
    %189 = vmatpush.msra.mxu0 %v169
    %190 = vmatpush.msra.mxu0 %v168
    %191 = vmatpush.msra.mxu0 %v167
    %192 = vmatmul.f32.gmra.mxu0 %v174
    %v193 = vpop.f32.mrf.mxu0
    %v194 = vadd.f32 %v172, %v193
    %195 = vdwg.mxu0
    %v196 = vadd.f32 %v133, %v194
    %v197 = vmax.f32 %v196, 0.0
    %s198 = scalar_lea.vmem [#allocation6], 64
    %v199 = vld [vmem:[%s198] sm:$0xff]
    %v200 = vld [vmem:[%s198 + $0x8] sm:$0xff]
    %v201 = vld [vmem:[%s198 + $0x10] sm:$0xff]
    %v202 = vld [vmem:[%s198 + $0x18] sm:$0xff]
    %v203 = vld [vmem:[#allocation8 + $0x2] sm:$0x1]
    %v204 = vperm.slane %v203, 0
    %v206 = vsel %vm141, %v197, 0
    %208 = vmatpush.msra.mxu0 0.0
    %209 = vmatpush.msra.mxu0 0.0
    %210 = vmatpush.msra.mxu0 0.0
    %211 = vmatpush.msra.mxu0 0.0
    %212 = vmatpush.msra.mxu0 0.0
    %213 = vmatpush.msra.mxu0 0.0
    %214 = vmatpush.msra.mxu0 0.0
    %215 = vmatpush.msra.mxu0 0.0
    %216 = vmatpush.msra.mxu0 0.0
    %217 = vmatpush.msra.mxu0 0.0
    %218 = vmatpush.msra.mxu0 0.0
    %219 = vmatpush.msra.mxu0 0.0
    %220 = vmatpush.msra.mxu0 %v202
    %221 = vmatpush.msra.mxu0 %v201
    %222 = vmatpush.msra.mxu0 %v200
    %223 = vmatpush.msra.mxu0 %v199
    %224 = vmatmul.f32.gmra.mxu0 %v206
    %v225 = vpop.f32.mrf.mxu0
    %v226 = vadd.f32 %v204, %v225
    %227 = vdwg.mxu0
    %v228 = vmax.f32 %v226, 0.0
    %s229 = scalar_lea.vmem [#allocation6], 96
    %v230 = vld [vmem:[%s229] sm:$0xff]
    %v231 = vld [vmem:[%s229 + $0x8] sm:$0xff]
    %v232 = vld [vmem:[%s229 + $0x10] sm:$0xff]
    %v233 = vld [vmem:[%s229 + $0x18] sm:$0xff]
    %v234 = vld [vmem:[#allocation8 + $0x3] sm:$0x1]
    %v235 = vperm.slane %v234, 0
    %v237 = vsel %vm141, %v228, 0
    %239 = vmatpush.msra.mxu0 0.0
    %240 = vmatpush.msra.mxu0 0.0
    %241 = vmatpush.msra.mxu0 0.0
    %242 = vmatpush.msra.mxu0 0.0
    %243 = vmatpush.msra.mxu0 0.0
    %244 = vmatpush.msra.mxu0 0.0
    %245 = vmatpush.msra.mxu0 0.0
    %246 = vmatpush.msra.mxu0 0.0
    %247 = vmatpush.msra.mxu0 0.0
    %248 = vmatpush.msra.mxu0 0.0
    %249 = vmatpush.msra.mxu0 0.0
    %250 = vmatpush.msra.mxu0 0.0
    %251 = vmatpush.msra.mxu0 %v233
    %252 = vmatpush.msra.mxu0 %v232
    %253 = vmatpush.msra.mxu0 %v231
    %254 = vmatpush.msra.mxu0 %v230
    %255 = vmatmul.f32.gmra.mxu0 %v237
    %v256 = vpop.f32.mrf.mxu0
    %v257 = vadd.f32 %v235, %v256
    %258 = vdwg.mxu0
    %v259 = vadd.f32 %v196, %v257
    %v260 = vld [vmem:[#allocation11] sm:$0xff]
    %v261 = vld [vmem:[#allocation11 + $0x8] sm:$0xff]
    %v262 = vld [vmem:[#allocation11 + $0x10] sm:$0xff]
    %v263 = vld [vmem:[#allocation11 + $0x18] sm:$0xff]
    %v264 = vld [vmem:[%s8] sm:$0x1]
    %v265 = vperm.slane %v264, 0
    %v267 = vsel %vm141, %v259, 0
    %269 = vmatpush.msra.mxu0 0.0
    %270 = vmatpush.msra.mxu0 0.0
    %271 = vmatpush.msra.mxu0 0.0
    %272 = vmatpush.msra.mxu0 0.0
    %273 = vmatpush.msra.mxu0 0.0
    %274 = vmatpush.msra.mxu0 0.0
    %275 = vmatpush.msra.mxu0 0.0
    %276 = vmatpush.msra.mxu0 0.0
    %277 = vmatpush.msra.mxu0 0.0
    %278 = vmatpush.msra.mxu0 0.0
    %279 = vmatpush.msra.mxu0 0.0
    %280 = vmatpush.msra.mxu0 0.0
    %281 = vmatpush.msra.mxu0 %v263
    %282 = vmatpush.msra.mxu0 %v262
    %283 = vmatpush.msra.mxu0 %v261
    %284 = vmatpush.msra.mxu0 %v260
    %285 = vmatmul.f32.gmra.mxu0 %v267
    %v286 = vpop.f32.mrf.mxu0
    %v287 = vadd.f32 %v265, %v286
    %288 = vdwg.mxu0
    %v289 = vld [vmem:[%s0] sm:$0xff]
    %vm290 = vcmp.ne.f32.partialorder %v289, %v289
    %v291 = vlaneseq
    %v292 = vand.u32 %v291, 127
    %v293 = vsel %vm290, %v287, %v289
    %vm294 = vcmp.lt.s32.totalorder %v292, 8
    %vm295 = vcmp.lt.s32.totalorder %v292, 16
    %v296 = vsel %vm290, 1, 0
    %v297 = vcvt.s32.f32 %v296
    %v298 = vsel %vm295, %v297, 0.0
    %v299 = vsel %vm294, %v293, %v298
    %v300 = vld [vmem:[#allocation9] sm:$0xff]
    %v301 = vld [vmem:[#allocation9 + $0x8] sm:$0xff]
    %v302 = vld [vmem:[#allocation9 + $0x10] sm:$0xff]
    %v303 = vld [vmem:[#allocation9 + $0x18] sm:$0xff]
    %v304 = vld [vmem:[%s6] sm:$0x1]
    %v305 = vperm.slane %v304, 0
    %v307 = vsel %vm141, %v299, 0
    %309 = vmatpush.msra.mxu0 0.0
    %310 = vmatpush.msra.mxu0 0.0
    %311 = vmatpush.msra.mxu0 0.0
    %312 = vmatpush.msra.mxu0 0.0
    %313 = vmatpush.msra.mxu0 0.0
    %314 = vmatpush.msra.mxu0 0.0
    %315 = vmatpush.msra.mxu0 0.0
    %316 = vmatpush.msra.mxu0 0.0
    %317 = vmatpush.msra.mxu0 0.0
    %318 = vmatpush.msra.mxu0 0.0
    %319 = vmatpush.msra.mxu0 0.0
    %320 = vmatpush.msra.mxu0 0.0
    %321 = vmatpush.msra.mxu0 %v303
    %322 = vmatpush.msra.mxu0 %v302
    %323 = vmatpush.msra.mxu0 %v301
    %324 = vmatpush.msra.mxu0 %v300
    %325 = vmatmul.f32.gmra.mxu0 %v307
    %v326 = vpop.f32.mrf.mxu0
    %v327 = vadd.f32 %v305, %v326
    %328 = vdwg.mxu0
    %s329 = scalar_lea.vmem [#allocation9], 32
    %v330 = vld [vmem:[%s329] sm:$0xff]
    %v331 = vld [vmem:[%s329 + $0x8] sm:$0xff]
    %v332 = vld [vmem:[%s329 + $0x10] sm:$0xff]
    %v333 = vld [vmem:[%s329 + $0x18] sm:$0xff]
    %v334 = vld [vmem:[%s6 + $0x1] sm:$0x1]
    %v335 = vperm.slane %v334, 0
    %v337 = vsel %vm141, %v287, 0
    %339 = vmatpush.msra.mxu0 0.0
    %340 = vmatpush.msra.mxu0 0.0
    %341 = vmatpush.msra.mxu0 0.0
    %342 = vmatpush.msra.mxu0 0.0
    %343 = vmatpush.msra.mxu0 0.0
    %344 = vmatpush.msra.mxu0 0.0
    %345 = vmatpush.msra.mxu0 0.0
    %346 = vmatpush.msra.mxu0 0.0
    %347 = vmatpush.msra.mxu0 0.0
    %348 = vmatpush.msra.mxu0 0.0
    %349 = vmatpush.msra.mxu0 0.0
    %350 = vmatpush.msra.mxu0 0.0
    %351 = vmatpush.msra.mxu0 %v333
    %352 = vmatpush.msra.mxu0 %v332
    %353 = vmatpush.msra.mxu0 %v331
    %354 = vmatpush.msra.mxu0 %v330
    %355 = vmatmul.f32.gmra.mxu0 %v337
    %v356 = vpop.f32.mrf.mxu0
    %v357 = vadd.f32 %v335, %v356
    %358 = vdwg.mxu0
    %v359 = vadd.f32 %v327, %v357
    %v360 = vxor.u32 %v359, 2147483648
    %v361 = vmul.f32 %v360, 1.442695
    %v362 = vpow.pop %v361
    %v363 = vadd.f32 %v362, 1.0
    %v364 = vrcp.pop %v363
    %v365 = vmul.f32 %v363, %v364
    %v366 = vsub.f32 1.0, %v365
    %v367 = vmul.f32 %v364, %v366
    %v368 = vadd.f32 %v364, %v367
    %vm369 = vweird.f32 %v363
    %vm370 = vweird.f32 %v364
    %vm371 = vmor %vm369, %vm370
    %v372 = vsel %vm371, %v364, %v368
    %v373 = vand.u32 2147483647, %v363
    %vm374 = vcmp.eq.f32.partialorder %v373, 8.507059e+37
    %v375 = vand.u32 %v363, 2147483648
    %v376 = vor.u32 1.1754944e-38, %v375
    %v377 = vsel %vm374, %v376, %v372
    %v378 = vmul.f32 1.0, %v377
    %380 = vrot.lane.b32.xlu0 %v357, 112
    %v381 = vpop.permute.xlu0 %380
    %v383 = vmul.f32 %v378, %v381
    %385 = vrot.lane.b32.xlu0 %v383, 16
    %v386 = vpop.permute.xlu0 %385
    %v388 = vadd.f32 %v327, %v386
    %v389 = vtanh.pop %v388
    %v390 = vsub.f32 1.0, %v378
    %392 = vrot.lane.b32.xlu0 %v389, 120
    %v393 = vpop.permute.xlu0 %392
    %v395 = vmul.f32 %v390, %v393
    %396 = vrot.lane.b32.xlu0 %v287, 8
    %v397 = vpop.permute.xlu0 %396
    %v399 = vmul.f32 %v378, %v397
    %v400 = vadd.f32 %v395, %v399
    %402 = vrot.lane.b32.xlu0 %v400, 120
    %v403 = vpop.permute.xlu0 %402
    %vm405 = vcmask 64512
    %v406 = vsel %vm405, %v403, 0.0
    %s407 = scalar_lea.vmem [#allocation11], 32
    %v408 = vld [vmem:[%s407] sm:$0xff]
    %v409 = vld [vmem:[%s407 + $0x8] sm:$0xff]
    %v410 = vld [vmem:[%s407 + $0x10] sm:$0xff]
    %v411 = vld [vmem:[%s407 + $0x18] sm:$0xff]
    %v412 = vld [vmem:[%s8 + $0x1] sm:$0x1]
    %v413 = vperm.slane %v412, 0
    %v415 = vsel %vm141, %v406, 0
    %417 = vmatpush.msra.mxu0 0.0
    %418 = vmatpush.msra.mxu0 0.0
    %419 = vmatpush.msra.mxu0 0.0
    %420 = vmatpush.msra.mxu0 0.0
    %421 = vmatpush.msra.mxu0 0.0
    %422 = vmatpush.msra.mxu0 0.0
    %423 = vmatpush.msra.mxu0 0.0
    %424 = vmatpush.msra.mxu0 0.0
    %425 = vmatpush.msra.mxu0 0.0
    %426 = vmatpush.msra.mxu0 0.0
    %427 = vmatpush.msra.mxu0 0.0
    %428 = vmatpush.msra.mxu0 0.0
    %429 = vmatpush.msra.mxu0 %v411
    %430 = vmatpush.msra.mxu0 %v410
    %431 = vmatpush.msra.mxu0 %v409
    %432 = vmatpush.msra.mxu0 %v408
    %433 = vmatmul.f32.gmra.mxu0 %v415
    %v434 = vpop.f32.mrf.mxu0
    %v435 = vadd.f32 %v413, %v434
    %436 = vdwg.mxu0
    %v437 = vmax.f32 %v435, 0.0
    %s438 = scalar_lea.vmem [#allocation6], 128
    %v439 = vld [vmem:[%s438] sm:$0xff]
    %v440 = vld [vmem:[%s438 + $0x8] sm:$0xff]
    %v441 = vld [vmem:[%s438 + $0x10] sm:$0xff]
    %v442 = vld [vmem:[%s438 + $0x18] sm:$0xff]
    %v443 = vld [vmem:[#allocation8 + $0x4] sm:$0x1]
    %v444 = vperm.slane %v443, 0
    %v446 = vsel %vm141, %v437, 0
    %448 = vmatpush.msra.mxu0 0.0
    %449 = vmatpush.msra.mxu0 0.0
    %450 = vmatpush.msra.mxu0 0.0
    %451 = vmatpush.msra.mxu0 0.0
    %452 = vmatpush.msra.mxu0 0.0
    %453 = vmatpush.msra.mxu0 0.0
    %454 = vmatpush.msra.mxu0 0.0
    %455 = vmatpush.msra.mxu0 0.0
    %456 = vmatpush.msra.mxu0 0.0
    %457 = vmatpush.msra.mxu0 0.0
    %458 = vmatpush.msra.mxu0 0.0
    %459 = vmatpush.msra.mxu0 0.0
    %460 = vmatpush.msra.mxu0 %v442
    %461 = vmatpush.msra.mxu0 %v441
    %462 = vmatpush.msra.mxu0 %v440
    %463 = vmatpush.msra.mxu0 %v439
    %464 = vmatmul.f32.gmra.mxu0 %v446
    %v465 = vpop.f32.mrf.mxu0
    %v466 = vadd.f32 %v444, %v465
    %467 = vdwg.mxu0
    %v468 = vmax.f32 %v466, 0.0
    %s469 = scalar_lea.vmem [#allocation6], 160
    %v470 = vld [vmem:[%s469] sm:$0xff]
    %v471 = vld [vmem:[%s469 + $0x8] sm:$0xff]
    %v472 = vld [vmem:[%s469 + $0x10] sm:$0xff]
    %v473 = vld [vmem:[%s469 + $0x18] sm:$0xff]
    %v474 = vld [vmem:[#allocation8 + $0x5] sm:$0x1]
    %v475 = vperm.slane %v474, 0
    %v477 = vsel %vm141, %v468, 0
    %479 = vmatpush.msra.mxu0 0.0
    %480 = vmatpush.msra.mxu0 0.0
    %481 = vmatpush.msra.mxu0 0.0
    %482 = vmatpush.msra.mxu0 0.0
    %483 = vmatpush.msra.mxu0 0.0
    %484 = vmatpush.msra.mxu0 0.0
    %485 = vmatpush.msra.mxu0 0.0
    %486 = vmatpush.msra.mxu0 0.0
    %487 = vmatpush.msra.mxu0 0.0
    %488 = vmatpush.msra.mxu0 0.0
    %489 = vmatpush.msra.mxu0 0.0
    %490 = vmatpush.msra.mxu0 0.0
    %491 = vmatpush.msra.mxu0 %v473
    %492 = vmatpush.msra.mxu0 %v472
    %493 = vmatpush.msra.mxu0 %v471
    %494 = vmatpush.msra.mxu0 %v470
    %495 = vmatmul.f32.gmra.mxu0 %v477
    %v496 = vpop.f32.mrf.mxu0
    %v497 = vadd.f32 %v475, %v496
    %498 = vdwg.mxu0
    %v499 = vadd.f32 %v435, %v497
    %v500 = vmax.f32 %v499, 0.0
    %s501 = scalar_lea.vmem [#allocation6], 192
    %v502 = vld [vmem:[%s501] sm:$0xff]
    %v503 = vld [vmem:[%s501 + $0x8] sm:$0xff]
    %v504 = vld [vmem:[%s501 + $0x10] sm:$0xff]
    %v505 = vld [vmem:[%s501 + $0x18] sm:$0xff]
    %v506 = vld [vmem:[#allocation8 + $0x6] sm:$0x1]
    %v507 = vperm.slane %v506, 0
    %v509 = vsel %vm141, %v500, 0
    %511 = vmatpush.msra.mxu0 0.0
    %512 = vmatpush.msra.mxu0 0.0
    %513 = vmatpush.msra.mxu0 0.0
    %514 = vmatpush.msra.mxu0 0.0
    %515 = vmatpush.msra.mxu0 0.0
    %516 = vmatpush.msra.mxu0 0.0
    %517 = vmatpush.msra.mxu0 0.0
    %518 = vmatpush.msra.mxu0 0.0
    %519 = vmatpush.msra.mxu0 0.0
    %520 = vmatpush.msra.mxu0 0.0
    %521 = vmatpush.msra.mxu0 0.0
    %522 = vmatpush.msra.mxu0 0.0
    %523 = vmatpush.msra.mxu0 %v505
    %524 = vmatpush.msra.mxu0 %v504
    %525 = vmatpush.msra.mxu0 %v503
    %526 = vmatpush.msra.mxu0 %v502
    %527 = vmatmul.f32.gmra.mxu0 %v509
    %v528 = vpop.f32.mrf.mxu0
    %v529 = vadd.f32 %v507, %v528
    %530 = vdwg.mxu0
    %v531 = vmax.f32 %v529, 0.0
    %s532 = scalar_lea.vmem [#allocation6], 224
    %v533 = vld [vmem:[%s532] sm:$0xff]
    %v534 = vld [vmem:[%s532 + $0x8] sm:$0xff]
    %v535 = vld [vmem:[%s532 + $0x10] sm:$0xff]
    %v536 = vld [vmem:[%s532 + $0x18] sm:$0xff]
    %v537 = vld [vmem:[#allocation8 + $0x7] sm:$0x1]
    %v538 = vperm.slane %v537, 0
    %v540 = vsel %vm141, %v531, 0
    %542 = vmatpush.msra.mxu0 0.0
    %543 = vmatpush.msra.mxu0 0.0
    %544 = vmatpush.msra.mxu0 0.0
    %545 = vmatpush.msra.mxu0 0.0
    %546 = vmatpush.msra.mxu0 0.0
    %547 = vmatpush.msra.mxu0 0.0
    %548 = vmatpush.msra.mxu0 0.0
    %549 = vmatpush.msra.mxu0 0.0
    %550 = vmatpush.msra.mxu0 0.0
    %551 = vmatpush.msra.mxu0 0.0
    %552 = vmatpush.msra.mxu0 0.0
    %553 = vmatpush.msra.mxu0 0.0
    %554 = vmatpush.msra.mxu0 %v536
    %555 = vmatpush.msra.mxu0 %v535
    %556 = vmatpush.msra.mxu0 %v534
    %557 = vmatpush.msra.mxu0 %v533
    %558 = vmatmul.f32.gmra.mxu0 %v540
    %v559 = vpop.f32.mrf.mxu0
    %v560 = vadd.f32 %v538, %v559
    %561 = vdwg.mxu0
    %v562 = vadd.f32 %v499, %v560
    %v563 = vld [vmem:[#allocation12] sm:$0xff]
    %v564 = vld [vmem:[#allocation12 + $0x8] sm:$0xff]
    %v565 = vld [vmem:[#allocation12 + $0x10] sm:$0xff]
    %v566 = vld [vmem:[#allocation12 + $0x18] sm:$0xff]
    %v567 = vld [vmem:[#allocation12 + $0x20] sm:$0xff]
    %v568 = vld [vmem:[#allocation12 + $0x28] sm:$0xff]
    %v569 = vld [vmem:[#allocation12 + $0x30] sm:$0xff]
    %v570 = vld [vmem:[#allocation12 + $0x38] sm:$0xff]
    %v571 = vld [vmem:[#allocation12 + $0x40] sm:$0xff]
    %v572 = vld [vmem:[#allocation12 + $0x48] sm:$0xff]
    %v573 = vld [vmem:[#allocation12 + $0x50] sm:$0xff]
    %v574 = vld [vmem:[#allocation12 + $0x58] sm:$0xff]
    %v576 = vsel %vm141, %v562, 0
    %578 = vmatpush.msra.mxu0 0.0
    %579 = vmatpush.msra.mxu0 0.0
    %580 = vmatpush.msra.mxu0 0.0
    %581 = vmatpush.msra.mxu0 0.0
    %582 = vmatpush.msra.mxu0 0.0
    %583 = vmatpush.msra.mxu0 0.0
    %584 = vmatpush.msra.mxu0 0.0
    %585 = vmatpush.msra.mxu0 0.0
    %586 = vmatpush.msra.mxu0 0.0
    %587 = vmatpush.msra.mxu0 0.0
    %588 = vmatpush.msra.mxu0 0.0
    %589 = vmatpush.msra.mxu0 0.0
    %590 = vmatpush.msra.mxu0 %v572
    %591 = vmatpush.msra.mxu0 %v569
    %592 = vmatpush.msra.mxu0 %v566
    %593 = vmatpush.msra.mxu0 %v563
    %594 = vmatmul.f32.gmra.mxu0 %v576
    %v595 = vpop.f32.mrf.mxu0
    %v596 = vadd.f32 0.0, %v595
    %597 = vdwg.mxu0
    %598 = vmatpush.msra.mxu0 0.0
    %599 = vmatpush.msra.mxu0 0.0
    %600 = vmatpush.msra.mxu0 0.0
    %601 = vmatpush.msra.mxu0 0.0
    %602 = vmatpush.msra.mxu0 0.0
    %603 = vmatpush.msra.mxu0 0.0
    %604 = vmatpush.msra.mxu0 0.0
    %605 = vmatpush.msra.mxu0 0.0
    %606 = vmatpush.msra.mxu0 0.0
    %607 = vmatpush.msra.mxu0 0.0
    %608 = vmatpush.msra.mxu0 0.0
    %609 = vmatpush.msra.mxu0 0.0
    %610 = vmatpush.msra.mxu0 %v573
    %611 = vmatpush.msra.mxu0 %v570
    %612 = vmatpush.msra.mxu0 %v567
    %613 = vmatpush.msra.mxu0 %v564
    %614 = vmatmul.f32.gmra.mxu0 %v576
    %v615 = vpop.f32.mrf.mxu0
    %v616 = vadd.f32 0.0, %v615
    %617 = vdwg.mxu0
    %618 = vmatpush.msra.mxu0 0.0
    %619 = vmatpush.msra.mxu0 0.0
    %620 = vmatpush.msra.mxu0 0.0
    %621 = vmatpush.msra.mxu0 0.0
    %622 = vmatpush.msra.mxu0 0.0
    %623 = vmatpush.msra.mxu0 0.0
    %624 = vmatpush.msra.mxu0 0.0
    %625 = vmatpush.msra.mxu0 0.0
    %626 = vmatpush.msra.mxu0 0.0
    %627 = vmatpush.msra.mxu0 0.0
    %628 = vmatpush.msra.mxu0 0.0
    %629 = vmatpush.msra.mxu0 0.0
    %630 = vmatpush.msra.mxu0 %v574
    %631 = vmatpush.msra.mxu0 %v571
    %632 = vmatpush.msra.mxu0 %v568
    %633 = vmatpush.msra.mxu0 %v565
    %634 = vmatmul.f32.gmra.mxu0 %v576
    %v635 = vpop.f32.mrf.mxu0
    %v636 = vadd.f32 0.0, %v635
    %637 = vdwg.mxu0
    %v638 = vld [vmem:[%s1] sm:$0xff]
    %640 = vset.pattern.permute.xlu0 0
    %641 = vperm.xlu0 %640, %v638
    %v642 = vpop.permute.xlu0 %641
    %v644 = vmul.f32 %v642, %v596
    %v645 = vadd.f32 %v562, %v644
    %v646 = vmul.f32 %v638, %v638
    %648 = vset.pattern.permute.xlu0 0
    %649 = vperm.xlu0 %648, %v646
    %v650 = vpop.permute.xlu0 %649
    %v652 = vmul.f32 %v650, %v596
    %654 = vrot.lane.b32.xlu0 %v652, 96
    %v655 = vpop.permute.xlu0 %654
    %v657 = vadd.f32 %v645, %v655
    %v658 = vmul.f32 %v646, %v638
    %660 = vset.pattern.permute.xlu0 0
    %661 = vperm.xlu0 %660, %v658
    %v662 = vpop.permute.xlu0 %661
    %v664 = vmul.f32 %v662, %v596
    %666 = vrot.lane.b32.xlu0 %v664, 64
    %v667 = vpop.permute.xlu0 %666
    %v669 = vadd.f32 %v657, %v667
    %v670 = vmul.f32 %v658, %v638
    %672 = vset.pattern.permute.xlu0 0
    %673 = vperm.xlu0 %672, %v670
    %v674 = vpop.permute.xlu0 %673
    %v676 = vmul.f32 %v674, %v596
    %678 = vrot.lane.b32.xlu0 %v676, 32
    %v679 = vpop.permute.xlu0 %678
    %v681 = vadd.f32 %v669, %v679
    %v682 = vmul.f32 %v670, %v638
    %684 = vset.pattern.permute.xlu0 0
    %685 = vperm.xlu0 %684, %v682
    %v686 = vpop.permute.xlu0 %685
    %v688 = vmul.f32 %v686, %v616
    %v689 = vadd.f32 %v681, %v688
    %v690 = vmul.f32 %v682, %v638
    %692 = vset.pattern.permute.xlu0 0
    %693 = vperm.xlu0 %692, %v690
    %v694 = vpop.permute.xlu0 %693
    %v696 = vmul.f32 %v694, %v616
    %698 = vrot.lane.b32.xlu0 %v696, 96
    %v699 = vpop.permute.xlu0 %698
    %v701 = vadd.f32 %v689, %v699
    %v702 = vmul.f32 %v690, %v638
    %704 = vset.pattern.permute.xlu0 0
    %705 = vperm.xlu0 %704, %v702
    %v706 = vpop.permute.xlu0 %705
    %v708 = vmul.f32 %v706, %v616
    %710 = vrot.lane.b32.xlu0 %v708, 64
    %v711 = vpop.permute.xlu0 %710
    %v713 = vadd.f32 %v701, %v711
    %v714 = vmul.f32 %v702, %v638
    %716 = vset.pattern.permute.xlu0 0
    %717 = vperm.xlu0 %716, %v714
    %v718 = vpop.permute.xlu0 %717
    %v720 = vmul.f32 %v718, %v616
    %722 = vrot.lane.b32.xlu0 %v720, 32
    %v723 = vpop.permute.xlu0 %722
    %v725 = vadd.f32 %v713, %v723
    %v726 = vmul.f32 %v714, %v638
    %728 = vset.pattern.permute.xlu0 0
    %729 = vperm.xlu0 %728, %v726
    %v730 = vpop.permute.xlu0 %729
    %v732 = vmul.f32 %v730, %v636
    %v733 = vadd.f32 %v725, %v732
    %v734 = vmul.f32 %v726, %v638
    %736 = vset.pattern.permute.xlu0 0
    %737 = vperm.xlu0 %736, %v734
    %v738 = vpop.permute.xlu0 %737
    %v740 = vmul.f32 %v738, %v636
    %742 = vrot.lane.b32.xlu0 %v740, 96
    %v743 = vpop.permute.xlu0 %742
    %v745 = vadd.f32 %v733, %v743
    %746 = vst.msk [vmem:[#allocation2] sm:$0xff] %vm141, %v745
    %748 = vrot.lane.b32.xlu0 %v745, 32
    %v749 = vpop.permute.xlu0 %748
    %v751 = vsel %vm141, %v562, %v749
    %vm752 = vcmask 523264
    %v753 = vsel %vm752, %v751, 0.0
    %754 = vst [vmem:[#allocation14] sm:$0xff] %v753
    // Predicated region
    $region70: #{tpu_custom_call.1} parent=1 // pred_check
      _
    $region71: #{tpu_custom_call.1} parent=1 // pred_check_branch
      %756 = sbr.rel (0) target = $region73
    $region72: #{tpu_custom_call.1} parent=1 // pred_region
      %758 = vsyncadd [#allocation5], 0
      %s760 = sshll.u32 [#allocation14], 4
      %s761 = int_to_ptr.vmem [resolvable:$true] %s760
      %s762 = sshll.u32 %s10, 4
      %s763 = int_to_ptr.hbm [resolvable:$true] %s762
      %765 = dma.vmem_to_hbm [thread:$0]  %s761, 128, %s763, [#allocation5]
    $region73: #{tpu_custom_call.1} parent=1 // pred_fallthru
      _
    // Predicated region
    $region74: #{tpu_custom_call.1} parent=1 // pred_check
      _
    $region75: #{tpu_custom_call.1} parent=1 // pred_check_branch
      %767 = sbr.rel (0) target = $region77
    $region76: #{tpu_custom_call.1} parent=1 // pred_region
      %769 = dma.done [#allocation5], 128
    $region77: #{tpu_custom_call.1} parent=1 // pred_fallthru
      _
    %770 = vsyncpa [#allocation4], 1
    %771 = vsyncpa [#allocation7], 1
    %772 = vsyncpa [#allocation10], 1
    %773 = vsyncpa [#allocation13], 1
    %774 = vsyncpa [#allocation5], 1

</llo_original>
